<compile_context>
chip_gen: v7x
topology: tpu7x:2x2x1
jax: 0.10.0
libtpu: 0.0.40
codegen_flags: <defaults>
</compile_context>

<pallas_src>
import jax
import jax.numpy as jnp
from jax.experimental import pallas as pl
from jax.experimental.pallas import tpu as pltpu


def _round_up(n: int, m: int) -> int:
    return ((n + m - 1) // m) * m


# ----------------------------------------------------------------------------
# Kernel: one (batch tile, K tile) grid step.
#   acc (f32 VMEM scratch) accumulates x_tile @ w1_ktile over K; on the last
#   K step we add b1, ReLU, do the second (small) matmul and store lane-dense.
# ----------------------------------------------------------------------------
def fc_model_kernel(x_ref, w1_ref, b1_ref, w2_ref, b2_ref, o_ref, acc_ref):
    k = pl.program_id(1)

    @pl.when(k == 0)
    def _():
        acc_ref[...] = jnp.zeros_like(acc_ref)

    acc_ref[...] += jnp.dot(x_ref[...], w1_ref[...],
                            preferred_element_type=jnp.float32)

    @pl.when(k == pl.num_programs(1) - 1)
    def _():
        h = jnp.maximum(acc_ref[...] + b1_ref[...], 0.0)        # bias + ReLU
        out = jnp.dot(h, w2_ref[...], preferred_element_type=jnp.float32)
        o_ref[...] = (out + b2_ref[...]).astype(o_ref.dtype)


# ----------------------------------------------------------------------------
# One-time (static) parameter preparation -- outside the per-call path.
# Weights are stored as (in_features, out_features) so the kernel computes
# x @ W + b, matching torch.nn.Linear's x @ weight.T + bias.
# ----------------------------------------------------------------------------
def prepare_fc_params(w1, b1, w2, b2):
    D, H = w1.shape
    C = w2.shape[1]
    D_pad = D if D % 128 == 0 else _round_up(D, 128)
    H_pad = _round_up(H, 128)
    C_pad = _round_up(C, 128)        # lane-dense output stores (no vst.msk)
    return dict(
        w1=jnp.pad(w1, ((0, D_pad - D), (0, H_pad - H))),
        b1=jnp.pad(b1, (0, H_pad - H)).reshape(1, H_pad),
        w2=jnp.pad(w2, ((0, H_pad - H), (0, C_pad - C))),
        b2=jnp.pad(b2, (0, C_pad - C)).reshape(1, C_pad),
        D=D, H=H, C=C, D_pad=D_pad, H_pad=H_pad, C_pad=C_pad,
    )


# ----------------------------------------------------------------------------
# Hardware-aware VMEM budget and tile selection.
# ----------------------------------------------------------------------------
def _vmem_cap_bytes():
    try:
        cap = int(pltpu.get_tpu_info().vmem_capacity_bytes)
    except Exception:
        cap = 64 << 20               # conservative default (v7x per-TC VMEM)
    return int(cap * 0.85)           # ~108 MiB on 128 MiB parts, ~54 MiB on v7x


def _vmem_budget_bytes(TB, tk, nk, H_pad, C_pad, single_buffer):
    f32 = 4
    w1_bufs = 1 if (nk == 1 and single_buffer) else 2
    small_bufs = 1 if single_buffer else 2
    return f32 * (
        2 * TB * tk                                    # x tile (double-buffered)
        + w1_bufs * tk * H_pad                         # w1 K-block(s)
        + small_bufs * (H_pad + H_pad * C_pad + C_pad) # b1, w2, b2 (resident)
        + 2 * TB * C_pad                               # output tile (double-buffered)
        + TB * H_pad                                   # f32 accumulator scratch
        + TB * (H_pad + C_pad)                         # finalize temporaries
    )


def _pick_tb(B_eff):
    # B_eff >= 8.  Big tiles for big batches; >=2 tiles for medium batches so
    # a ("parallel", ...) grid can feed both v7x TensorCores.
    if B_eff >= 1024:
        tb = 512
    elif B_eff >= 512:
        tb = 256
    elif B_eff >= 256:
        tb = 128
    elif B_eff >= 64:
        tb = _round_up((B_eff + 1) // 2, 8)            # 2 tiles
    else:
        tb = _round_up(B_eff, 8)
    return max(8, min(tb, (B_eff // 8) * 8))           # TB <= B_eff, multiple of 8


def _select_tiling(B_eff, D_pad, H_pad, C_pad, cap):
    TB = _pick_tb(B_eff)
    while True:
        if _vmem_budget_bytes(TB, D_pad, 1, H_pad, C_pad, True) <= cap:
            return TB, D_pad, 1                        # w1 fully resident (fast path)
        # K-tile the contraction dim so w1's VMEM footprint stays bounded
        # (needed for very large input_features, earliest on v7x's 64 MiB VMEM).
        for nk in range(2, max(2, D_pad // 128) + 1):
            if D_pad % nk:
                continue
            tk = D_pad // nk
            if tk % 128:
                continue
            if _vmem_budget_bytes(TB, tk, nk, H_pad, C_pad, True) <= cap:
                return TB, tk, nk
        if TB <= 8:
            return 8, 128, D_pad // 128                # last resort
        TB = max(8, _round_up(TB // 2, 8))


# ----------------------------------------------------------------------------
# Forward pass.
# ----------------------------------------------------------------------------
def fc_model_forward(x, params):
    """x: (B, ...) -> (B, num_classes); == nn.Sequential(Flatten, Linear, ReLU, Linear)."""
    w1_p, b1_p = params["w1"], params["b1"]
    w2_p, b2_p = params["w2"], params["b2"]
    D, H, C = params["D"], params["H"], params["C"]
    D_pad, H_pad, C_pad = params["D_pad"], params["H_pad"], params["C_pad"]

    B = x.shape[0]
    x_flat = x.reshape(B, -1)                          # nn.Flatten (row-major)
    if x_flat.shape[1] != D:
        raise ValueError("input feature size mismatch with prepared params")

    # Pad x only when strictly required:
    #  * feature dim: zero-pad iff D % 128 != 0 (the reduction dim must never
    #    be ragged/garbage),
    #  * batch dim: pad tiny batches up to one 8-row tile.  Otherwise the
    #    ragged last batch tile is handled by the grid; its garbage rows are
    #    independent and sliced off below.
    B_eff = max(B, 8)
    pad_b, pad_d = B_eff - B, D_pad - D
    x_in = jnp.pad(x_flat, ((0, pad_b), (0, pad_d))) if (pad_b or pad_d) else x_flat

    cap = _vmem_cap_bytes()
    TB, tk, nk = _select_tiling(B_eff, D_pad, H_pad, C_pad, cap)
    grid = (pl.cdiv(B_eff, TB), nk)

    cost = pl.CostEstimate(                            # real (unpadded) work
        flops=2 * B * D * H + 2 * B * H * C,
        transcendentals=0,
        bytes_accessed=4 * (B * D + D * H + H * C + B * C + H + C),
    )

    def run(single_buffer):
        if nk == 1 and single_buffer:
            w1_spec = pl.BlockSpec((tk, H_pad), lambda i, k: (0, 0),
                                   pipeline_mode=pl.Buffered(1))
        else:
            w1_spec = pl.BlockSpec((tk, H_pad), lambda i, k: (k, 0))

        if single_buffer:
            def resident(shape):
                return pl.BlockSpec(shape, lambda i, k: (0, 0),
                                    pipeline_mode=pl.Buffered(1))
        else:
            def resident(shape):
                return pl.BlockSpec(shape, lambda i, k: (0, 0))

        vmem_need = _vmem_budget_bytes(TB, tk, nk, H_pad, C_pad, single_buffer)
        vmem_limit = int(min(cap, max(vmem_need + (4 << 20), 8 << 20)))

        return pl.pallas_call(
            fc_model_kernel,
            out_shape=jax.ShapeDtypeStruct((B_eff, C_pad), jnp.float32),
            grid=grid,
            in_specs=[
                pl.BlockSpec((TB, tk), lambda i, k: (i, k)),   # x: streamed
                w1_spec,                                        # w1
                resident((1, H_pad)),                           # b1
                resident((H_pad, C_pad)),                       # w2
                resident((1, C_pad)),                           # b2
            ],
            out_specs=pl.BlockSpec((TB, C_pad), lambda i, k: (i, 0)),
            scratch_shapes=[pltpu.VMEM((TB, H_pad), jnp.float32)],
            compiler_params=pltpu.CompilerParams(
                dimension_semantics=("parallel", "arbitrary"),
                vmem_limit_bytes=vmem_limit,
            ),
            cost_estimate=cost,
        )(x_in, w1_p, b1_p, w2_p, b2_p)

    try:
        out_padded = run(single_buffer=True)
    except Exception:
        # This JAX build rejected pipeline_mode=pl.Buffered(1); fall back to
        # default (double) buffering of the resident operands.
        out_padded = run(single_buffer=False)

    return out_padded[:B, :C]


if __name__ == "__main__":
    # Small shapes consistent with the module's forward:
    # x: (B, C, H, W) -> flatten -> input_features = C*H*W
    B, C_in, Himg, Wimg = 2, 4, 16, 16
    input_features = C_in * Himg * Wimg          # 1024 (multiple of 128 -> no x pad)
    hidden = 32                                  # small; exercises H padding
    num_classes = 10                             # exercises lane (C) padding

    key = jax.random.PRNGKey(0)
    kx, kw1, kb1, kw2, kb2 = jax.random.split(key, 5)

    x = jax.random.normal(kx, (B, C_in, Himg, Wimg), dtype=jnp.float32)

    # Deterministic torch.nn.Linear-like init, stored as (in, out) so the
    # kernel computes x @ W + b (== PyTorch's x @ weight.T + bias).
    bound1 = 1.0 / (input_features ** 0.5)
    w1 = jax.random.uniform(kw1, (input_features, hidden), jnp.float32,
                            minval=-bound1, maxval=bound1)
    b1 = jax.random.uniform(kb1, (hidden,), jnp.float32,
                            minval=-bound1, maxval=bound1)
    bound2 = 1.0 / (hidden ** 0.5)
    w2 = jax.random.uniform(kw2, (hidden, num_classes), jnp.float32,
                            minval=-bound2, maxval=bound2)
    b2 = jax.random.uniform(kb2, (num_classes,), jnp.float32,
                            minval=-bound2, maxval=bound2)

    params = prepare_fc_params(w1, b1, w2, b2)   # static padding: once, not per call
    out = fc_model_forward(x, params)
    out = jax.block_until_ready(out)

    # Pure-JAX reference check
    x_flat = x.reshape(B, -1)
    ref = jnp.maximum(x_flat @ w1 + b1, 0.0) @ w2 + b2
    assert out.shape == (B, num_classes)
    assert jnp.allclose(out, ref, atol=1e-4, rtol=1e-4)

    print("KERNEL_OK")
</pallas_src>

<mosaic_0001>
module attributes {stable_mosaic.version = 11 : i64} {
  func.func @fc_model_kernel(%arg0: i32, %arg1: i32, %arg2: memref<8x1024xf32, #tpu.memory_space<vmem>>, %arg3: memref<1024x128xf32, #tpu.memory_space<vmem>>, %arg4: memref<1x128xf32, #tpu.memory_space<vmem>>, %arg5: memref<128x128xf32, #tpu.memory_space<vmem>>, %arg6: memref<1x128xf32, #tpu.memory_space<vmem>>, %arg7: memref<8x128xf32, #tpu.memory_space<vmem>>, %arg8: memref<8x128xf32, #tpu.memory_space<vmem>>) attributes {dimension_semantics = [#tpu.dimension_semantics<parallel>, #tpu.dimension_semantics<arbitrary>], iteration_bounds = array<i64: 1, 1>, scalar_prefetch = 0 : i64, scratch_operands = 1 : i64, tpu.core_type = #tpu.core_type<tc>, window_params = [{transform_indices = @transform_0, window_bounds = array<i64: 8, 1024>}, {pipeline_mode = #tpu.pipeline_mode<synchronous>, transform_indices = @transform_1, window_bounds = array<i64: 1024, 128>}, {pipeline_mode = #tpu.pipeline_mode<synchronous>, transform_indices = @transform_2, window_bounds = array<i64: 1, 128>}, {pipeline_mode = #tpu.pipeline_mode<synchronous>, transform_indices = @transform_3, window_bounds = array<i64: 128, 128>}, {pipeline_mode = #tpu.pipeline_mode<synchronous>, transform_indices = @transform_4, window_bounds = array<i64: 1, 128>}, {transform_indices = @transform_5, window_bounds = array<i64: 8, 128>}]} {
    %c0_i32 = arith.constant 0 : i32
    %0 = arith.cmpi eq, %arg1, %c0_i32 : i32
    %1 = arith.extui %0 : i1 to i32
    %c0_i32_0 = arith.constant 0 : i32
    %2 = arith.cmpi ne, %1, %c0_i32_0 : i32
    scf.if %2 {
      %cst_10 = arith.constant 0.000000e+00 : f32
      %12 = vector.broadcast %cst_10 : f32 to vector<8x128xf32>
      %c0_11 = arith.constant 0 : index
      %c0_12 = arith.constant 0 : index
      %13 = vector.load %arg8[%c0_11, %c0_12] : memref<8x128xf32, #tpu.memory_space<vmem>>, vector<8x128xf32>
      tpu.vector_store %arg8[%c0_11, %c0_12], %12 {strides = array<i32>} : memref<8x128xf32, #tpu.memory_space<vmem>>, vector<8x128xf32>,
    } else {
    }
    %c0 = arith.constant 0 : index
    %c0_1 = arith.constant 0 : index
    %3 = vector.load %arg8[%c0, %c0_1] : memref<8x128xf32, #tpu.memory_space<vmem>>, vector<8x128xf32>
    %c0_2 = arith.constant 0 : index
    %c0_3 = arith.constant 0 : index
    %4 = vector.load %arg2[%c0_2, %c0_3] : memref<8x1024xf32, #tpu.memory_space<vmem>>, vector<8x1024xf32>
    %c0_4 = arith.constant 0 : index
    %c0_5 = arith.constant 0 : index
    %5 = vector.load %arg3[%c0_4, %c0_5] : memref<1024x128xf32, #tpu.memory_space<vmem>>, vector<1024x128xf32>
    %cst = arith.constant dense<0.000000e+00> : vector<8x128xf32>
    %6 = tpu.matmul %4, %5, %cst {dimension_numbers = #tpu.dot_dimension_numbers<[1], [0], [0], [1], [0, 0, 1, 1], [], []>} : vector<8x1024xf32>, vector<1024x128xf32>, vector<8x128xf32> -> vector<8x128xf32>
    %7 = arith.addf %3, %6 : vector<8x128xf32>
    %c0_6 = arith.constant 0 : index
    %c0_7 = arith.constant 0 : index
    %8 = vector.load %arg8[%c0_6, %c0_7] : memref<8x128xf32, #tpu.memory_space<vmem>>, vector<8x128xf32>
    tpu.vector_store %arg8[%c0_6, %c0_7], %7 {strides = array<i32>} : memref<8x128xf32, #tpu.memory_space<vmem>>, vector<8x128xf32>,
    %c0_i32_8 = arith.constant 0 : i32
    %9 = arith.cmpi eq, %arg1, %c0_i32_8 : i32
    %10 = arith.extui %9 : i1 to i32
    %c0_i32_9 = arith.constant 0 : i32
    %11 = arith.cmpi ne, %10, %c0_i32_9 : i32
    scf.if %11 {
      %c0_10 = arith.constant 0 : index
      %c0_11 = arith.constant 0 : index
      %12 = vector.load %arg8[%c0_10, %c0_11] : memref<8x128xf32, #tpu.memory_space<vmem>>, vector<8x128xf32>
      %c0_12 = arith.constant 0 : index
      %c0_13 = arith.constant 0 : index
      %13 = vector.load %arg4[%c0_12, %c0_13] : memref<1x128xf32, #tpu.memory_space<vmem>>, vector<1x128xf32>
      %14 = vector.broadcast %13 : vector<1x128xf32> to vector<8x128xf32>
      %15 = arith.addf %12, %14 : vector<8x128xf32>
      %cst_14 = arith.constant 0.000000e+00 : f32
      %16 = vector.broadcast %cst_14 : f32 to vector<8x128xf32>
      %17 = arith.maximumf %15, %16 : vector<8x128xf32>
      %c0_15 = arith.constant 0 : index
      %c0_16 = arith.constant 0 : index
      %18 = vector.load %arg5[%c0_15, %c0_16] : memref<128x128xf32, #tpu.memory_space<vmem>>, vector<128x128xf32>
      %cst_17 = arith.constant dense<0.000000e+00> : vector<8x128xf32>
      %19 = tpu.matmul %17, %18, %cst_17 {dimension_numbers = #tpu.dot_dimension_numbers<[1], [0], [0], [1], [0, 0, 1, 1], [], []>} : vector<8x128xf32>, vector<128x128xf32>, vector<8x128xf32> -> vector<8x128xf32>
      %c0_18 = arith.constant 0 : index
      %c0_19 = arith.constant 0 : index
      %20 = vector.load %arg6[%c0_18, %c0_19] : memref<1x128xf32, #tpu.memory_space<vmem>>, vector<1x128xf32>
      %21 = vector.broadcast %20 : vector<1x128xf32> to vector<8x128xf32>
      %22 = arith.addf %19, %21 : vector<8x128xf32>
      %c0_20 = arith.constant 0 : index
      %c0_21 = arith.constant 0 : index
      %23 = vector.load %arg7[%c0_20, %c0_21] : memref<8x128xf32, #tpu.memory_space<vmem>>, vector<8x128xf32>
      tpu.vector_store %arg7[%c0_20, %c0_21], %22 {strides = array<i32>} : memref<8x128xf32, #tpu.memory_space<vmem>>, vector<8x128xf32>,
    } else {
    }
    return
  }
  func.func @transform_0(%arg0: i32, %arg1: i32) -> (i32, i32) {
    %c0_i32 = arith.constant 0 : i32
    return %arg0, %arg1 : i32, i32
  }
  func.func @transform_1(%arg0: i32, %arg1: i32) -> (i32, i32) {
    %c0_i32 = arith.constant 0 : i32
    %c0_i32_0 = arith.constant 0 : i32
    %c0_i32_1 = arith.constant 0 : i32
    return %c0_i32, %c0_i32_0 : i32, i32
  }
  func.func @transform_2(%arg0: i32, %arg1: i32) -> (i32, i32) {
    %c0_i32 = arith.constant 0 : i32
    %c0_i32_0 = arith.constant 0 : i32
    %c0_i32_1 = arith.constant 0 : i32
    return %c0_i32, %c0_i32_0 : i32, i32
  }
  func.func @transform_3(%arg0: i32, %arg1: i32) -> (i32, i32) {
    %c0_i32 = arith.constant 0 : i32
    %c0_i32_0 = arith.constant 0 : i32
    %c0_i32_1 = arith.constant 0 : i32
    return %c0_i32, %c0_i32_0 : i32, i32
  }
  func.func @transform_4(%arg0: i32, %arg1: i32) -> (i32, i32) {
    %c0_i32 = arith.constant 0 : i32
    %c0_i32_0 = arith.constant 0 : i32
    %c0_i32_1 = arith.constant 0 : i32
    return %c0_i32, %c0_i32_0 : i32, i32
  }
  func.func @transform_5(%arg0: i32, %arg1: i32) -> (i32, i32) {
    %c0_i32 = arith.constant 0 : i32
    %c0_i32_0 = arith.constant 0 : i32
    return %arg0, %c0_i32 : i32, i32
  }
}

module attributes {stable_mosaic.version = 11 : i64} {
  func.func @fc_model_kernel(%arg0: i32, %arg1: i32, %arg2: memref<8x1024xf32, #tpu.memory_space<vmem>>, %arg3: memref<1024x128xf32, #tpu.memory_space<vmem>>, %arg4: memref<1x128xf32, #tpu.memory_space<vmem>>, %arg5: memref<128x128xf32, #tpu.memory_space<vmem>>, %arg6: memref<1x128xf32, #tpu.memory_space<vmem>>, %arg7: memref<8x128xf32, #tpu.memory_space<vmem>>, %arg8: memref<8x128xf32, #tpu.memory_space<vmem>>) attributes {dimension_semantics = [#tpu.dimension_semantics<parallel>, #tpu.dimension_semantics<arbitrary>], iteration_bounds = array<i64: 1, 1>, scalar_prefetch = 0 : i64, scratch_operands = 1 : i64, tpu.core_type = #tpu.core_type<tc>, window_params = [{transform_indices = @transform_0, window_bounds = array<i64: 8, 1024>}, {transform_indices = @transform_1, window_bounds = array<i64: 1024, 128>}, {pipeline_mode = #tpu.pipeline_mode<synchronous>, transform_indices = @transform_2, window_bounds = array<i64: 1, 128>}, {pipeline_mode = #tpu.pipeline_mode<synchronous>, transform_indices = @transform_3, window_bounds = array<i64: 128, 128>}, {pipeline_mode = #tpu.pipeline_mode<synchronous>, transform_indices = @transform_4, window_bounds = array<i64: 1, 128>}, {transform_indices = @transform_5, window_bounds = array<i64: 8, 128>}]} {
    %c0_i32 = arith.constant 0 : i32
    %0 = arith.cmpi eq, %arg1, %c0_i32 : i32
    %1 = arith.extui %0 : i1 to i32
    %c0_i32_0 = arith.constant 0 : i32
    %2 = arith.cmpi ne, %1, %c0_i32_0 : i32
    scf.if %2 {
      %cst_10 = arith.constant 0.000000e+00 : f32
      %12 = vector.broadcast %cst_10 : f32 to vector<8x128xf32>
      %c0_11 = arith.constant 0 : index
      %c0_12 = arith.constant 0 : index
      %13 = vector.load %arg8[%c0_11, %c0_12] : memref<8x128xf32, #tpu.memory_space<vmem>>, vector<8x128xf32>
      tpu.vector_store %arg8[%c0_11, %c0_12], %12 {strides = array<i32>} : memref<8x128xf32, #tpu.memory_space<vmem>>, vector<8x128xf32>,
    } else {
    }
    %c0 = arith.constant 0 : index
    %c0_1 = arith.constant 0 : index
    %3 = vector.load %arg8[%c0, %c0_1] : memref<8x128xf32, #tpu.memory_space<vmem>>, vector<8x128xf32>
    %c0_2 = arith.constant 0 : index
    %c0_3 = arith.constant 0 : index
    %4 = vector.load %arg2[%c0_2, %c0_3] : memref<8x1024xf32, #tpu.memory_space<vmem>>, vector<8x1024xf32>
    %c0_4 = arith.constant 0 : index
    %c0_5 = arith.constant 0 : index
    %5 = vector.load %arg3[%c0_4, %c0_5] : memref<1024x128xf32, #tpu.memory_space<vmem>>, vector<1024x128xf32>
    %cst = arith.constant dense<0.000000e+00> : vector<8x128xf32>
    %6 = tpu.matmul %4, %5, %cst {dimension_numbers = #tpu.dot_dimension_numbers<[1], [0], [0], [1], [0, 0, 1, 1], [], []>} : vector<8x1024xf32>, vector<1024x128xf32>, vector<8x128xf32> -> vector<8x128xf32>
    %7 = arith.addf %3, %6 : vector<8x128xf32>
    %c0_6 = arith.constant 0 : index
    %c0_7 = arith.constant 0 : index
    %8 = vector.load %arg8[%c0_6, %c0_7] : memref<8x128xf32, #tpu.memory_space<vmem>>, vector<8x128xf32>
    tpu.vector_store %arg8[%c0_6, %c0_7], %7 {strides = array<i32>} : memref<8x128xf32, #tpu.memory_space<vmem>>, vector<8x128xf32>,
    %c0_i32_8 = arith.constant 0 : i32
    %9 = arith.cmpi eq, %arg1, %c0_i32_8 : i32
    %10 = arith.extui %9 : i1 to i32
    %c0_i32_9 = arith.constant 0 : i32
    %11 = arith.cmpi ne, %10, %c0_i32_9 : i32
    scf.if %11 {
      %c0_10 = arith.constant 0 : index
      %c0_11 = arith.constant 0 : index
      %12 = vector.load %arg8[%c0_10, %c0_11] : memref<8x128xf32, #tpu.memory_space<vmem>>, vector<8x128xf32>
      %c0_12 = arith.constant 0 : index
      %c0_13 = arith.constant 0 : index
      %13 = vector.load %arg4[%c0_12, %c0_13] : memref<1x128xf32, #tpu.memory_space<vmem>>, vector<1x128xf32>
      %14 = vector.broadcast %13 : vector<1x128xf32> to vector<8x128xf32>
      %15 = arith.addf %12, %14 : vector<8x128xf32>
      %cst_14 = arith.constant 0.000000e+00 : f32
      %16 = vector.broadcast %cst_14 : f32 to vector<8x128xf32>
      %17 = arith.maximumf %15, %16 : vector<8x128xf32>
      %c0_15 = arith.constant 0 : index
      %c0_16 = arith.constant 0 : index
      %18 = vector.load %arg5[%c0_15, %c0_16] : memref<128x128xf32, #tpu.memory_space<vmem>>, vector<128x128xf32>
      %cst_17 = arith.constant dense<0.000000e+00> : vector<8x128xf32>
      %19 = tpu.matmul %17, %18, %cst_17 {dimension_numbers = #tpu.dot_dimension_numbers<[1], [0], [0], [1], [0, 0, 1, 1], [], []>} : vector<8x128xf32>, vector<128x128xf32>, vector<8x128xf32> -> vector<8x128xf32>
      %c0_18 = arith.constant 0 : index
      %c0_19 = arith.constant 0 : index
      %20 = vector.load %arg6[%c0_18, %c0_19] : memref<1x128xf32, #tpu.memory_space<vmem>>, vector<1x128xf32>
      %21 = vector.broadcast %20 : vector<1x128xf32> to vector<8x128xf32>
      %22 = arith.addf %19, %21 : vector<8x128xf32>
      %c0_20 = arith.constant 0 : index
      %c0_21 = arith.constant 0 : index
      %23 = vector.load %arg7[%c0_20, %c0_21] : memref<8x128xf32, #tpu.memory_space<vmem>>, vector<8x128xf32>
      tpu.vector_store %arg7[%c0_20, %c0_21], %22 {strides = array<i32>} : memref<8x128xf32, #tpu.memory_space<vmem>>, vector<8x128xf32>,
    } else {
    }
    return
  }
  func.func @transform_0(%arg0: i32, %arg1: i32) -> (i32, i32) {
    %c0_i32 = arith.constant 0 : i32
    return %arg0, %arg1 : i32, i32
  }
  func.func @transform_1(%arg0: i32, %arg1: i32) -> (i32, i32) {
    %c0_i32 = arith.constant 0 : i32
    %c0_i32_0 = arith.constant 0 : i32
    return %arg1, %c0_i32 : i32, i32
  }
  func.func @transform_2(%arg0: i32, %arg1: i32) -> (i32, i32) {
    %c0_i32 = arith.constant 0 : i32
    %c0_i32_0 = arith.constant 0 : i32
    %c0_i32_1 = arith.constant 0 : i32
    return %c0_i32, %c0_i32_0 : i32, i32
  }
  func.func @transform_3(%arg0: i32, %arg1: i32) -> (i32, i32) {
    %c0_i32 = arith.constant 0 : i32
    %c0_i32_0 = arith.constant 0 : i32
    %c0_i32_1 = arith.constant 0 : i32
    return %c0_i32, %c0_i32_0 : i32, i32
  }
  func.func @transform_4(%arg0: i32, %arg1: i32) -> (i32, i32) {
    %c0_i32 = arith.constant 0 : i32
    %c0_i32_0 = arith.constant 0 : i32
    %c0_i32_1 = arith.constant 0 : i32
    return %c0_i32, %c0_i32_0 : i32, i32
  }
  func.func @transform_5(%arg0: i32, %arg1: i32) -> (i32, i32) {
    %c0_i32 = arith.constant 0 : i32
    %c0_i32_0 = arith.constant 0 : i32
    return %arg0, %c0_i32 : i32, i32
  }
}

</mosaic_0001>

<llo_original>
// kernel: tpu_custom_call.1
$region0: #{tpu_custom_call.1}
  #allocation0 [shape = 'u32[]', space=smem, size = 0x4, offset = 0x4, fixed_abs, tag = 'smem constant byte address 0x4 - core index']
  #allocation1 [shape = 'u32[144,128]{1,0:T(1,128)}', space=vmem, size = 0x12000, scoped, tag = 'internal scratch']
  #allocation2 [shape = 'f32[8,128]{1,0:T(8,128)}', space=vmem, size = 0x1000, scoped, tag = 'scratch operand']
  %s0 = inlined_call_operand.hbm [shape: f32[8,1024], index: 0, kind: input, shape index: {}]
  %s1 = inlined_call_operand.hbm [shape: f32[1024,128], index: 1, kind: input, shape index: {}]
  %s2 = inlined_call_operand.vmem [shape: f32[1,128], index: 2, kind: input, shape index: {}]
  %s3 = inlined_call_operand.hbm [shape: f32[128,128], index: 3, kind: input, shape index: {}]
  %s4 = inlined_call_operand.vmem [shape: f32[1,128], index: 4, kind: input, shape index: {}]
  %s5 = inlined_call_operand.hbm [shape: f32[8,128], index: 5, kind: output, shape index: {}]
  %s6 = sld [smem:[#allocation0]]
  $region50: #{tpu_custom_call.1} parent=0
    _
  %s8 = ssub.s32 1, %s6
  %s9 = scalar_select 0, %s8, %s6
  $region1: #{tpu_custom_call.1} parent=0
    #allocation3 [shape = 'u8[32768]{0}', space=vmem, size = 0x8000, scoped, tag = 'input window, operand 0, single buffered']
    #allocation4 [shape = 's32[1]{0}', space=sflag, size = 0x4, scoped, tag = 'scoped memory for tpu_custom_call.1']
    #allocation5 [shape = 's32[1]{0}', space=sflag, size = 0x4, scoped, tag = 'scoped memory for tpu_custom_call.1']
    #allocation6 [shape = 'u8[524288]{0}', space=vmem, size = 0x80000, scoped, tag = 'input window, operand 1, single buffered']
    #allocation7 [shape = 's32[1]{0}', space=sflag, size = 0x4, scoped, tag = 'scoped memory for tpu_custom_call.1']
    #allocation8 [shape = 'u8[65536]{0}', space=vmem, size = 0x10000, scoped, tag = 'input window, operand 3, single buffered']
    #allocation9 [shape = 'u8[4096]{0}', space=vmem, size = 0x1000, scoped, tag = 'output window, operand 0, single buffered']
    %10 = vsyncpa [#allocation4], 0
    %11 = vsyncpa [#allocation7], 0
    %12 = vsyncpa [#allocation5], 0
    // Predicated region
    $region2: #{tpu_custom_call.1} parent=1 // pred_check
      _
    $region3: #{tpu_custom_call.1} parent=1 // pred_check_branch
      %14 = sbr.rel (0) target = $region5
    $region4: #{tpu_custom_call.1} parent=1 // pred_region
      %s16 = ssub.s32 1024, 1024
      %17 = vsyncadd [#allocation4], %s16
      %s19 = sshll.u32 [#allocation3], 4
      %s20 = int_to_ptr.vmem [resolvable:$true] %s19
      %22 = dma.hbm_to_vmem [thread:$0]  %s0, 1024, %s20, [#allocation4]
    $region5: #{tpu_custom_call.1} parent=1 // pred_fallthru
      _
    // Predicated region
    $region6: #{tpu_custom_call.1} parent=1 // pred_check
      _
    $region7: #{tpu_custom_call.1} parent=1 // pred_check_branch
      %24 = sbr.rel (0) target = $region9
    $region8: #{tpu_custom_call.1} parent=1 // pred_region
      %s26 = ssub.s32 16384, 16384
      %27 = vsyncadd [#allocation7], %s26
      %s28 = sshll.u32 [#allocation6], 4
      %s29 = int_to_ptr.vmem [resolvable:$true] %s28
      %34 = dma.hbm_to_vmem [thread:$0]  %s1, 16384, %s29, [#allocation7], 128, 128, 8
    $region9: #{tpu_custom_call.1} parent=1 // pred_fallthru
      _
    // Predicated region
    $region10: #{tpu_custom_call.1} parent=1 // pred_check
      _
    $region11: #{tpu_custom_call.1} parent=1 // pred_check_branch
      %36 = sbr.rel (0) target = $region13
    $region12: #{tpu_custom_call.1} parent=1 // pred_region
      _
    $region13: #{tpu_custom_call.1} parent=1 // pred_fallthru
      _
    // Predicated region
    $region14: #{tpu_custom_call.1} parent=1 // pred_check
      _
    $region15: #{tpu_custom_call.1} parent=1 // pred_check_branch
      %38 = sbr.rel (0) target = $region17
    $region16: #{tpu_custom_call.1} parent=1 // pred_region
      %s40 = ssub.s32 2048, 2048
      %41 = vsyncadd [#allocation7], %s40
      %s42 = sshll.u32 [#allocation8], 4
      %s43 = int_to_ptr.vmem [resolvable:$true] %s42
      %48 = dma.hbm_to_vmem [thread:$0]  %s3, 2048, %s43, [#allocation7], 128, 128, 8
    $region17: #{tpu_custom_call.1} parent=1 // pred_fallthru
      _
    // Predicated region
    $region18: #{tpu_custom_call.1} parent=1 // pred_check
      _
    $region19: #{tpu_custom_call.1} parent=1 // pred_check_branch
      %50 = sbr.rel (0) target = $region21
    $region20: #{tpu_custom_call.1} parent=1 // pred_region
      _
    $region21: #{tpu_custom_call.1} parent=1 // pred_fallthru
      _
    // Predicated region
    $region22: #{tpu_custom_call.1} parent=1 // pred_check
      _
    $region23: #{tpu_custom_call.1} parent=1 // pred_check_branch
      %52 = sbr.rel (0) target = $region25
    $region24: #{tpu_custom_call.1} parent=1 // pred_region
      %53 = dma.done [#allocation4], 1024
    $region25: #{tpu_custom_call.1} parent=1 // pred_fallthru
      _
    // Predicated region
    $region26: #{tpu_custom_call.1} parent=1 // pred_check
      _
    $region27: #{tpu_custom_call.1} parent=1 // pred_check_branch
      %55 = sbr.rel (0) target = $region29
    $region28: #{tpu_custom_call.1} parent=1 // pred_region
      %56 = dma.done [#allocation7], 16384
    $region29: #{tpu_custom_call.1} parent=1 // pred_fallthru
      _
    // Predicated region
    $region30: #{tpu_custom_call.1} parent=1 // pred_check
      _
    $region31: #{tpu_custom_call.1} parent=1 // pred_check_branch
      %58 = sbr.rel (0) target = $region33
    $region32: #{tpu_custom_call.1} parent=1 // pred_region
      %59 = dma.done [#allocation7], 2048
    $region33: #{tpu_custom_call.1} parent=1 // pred_fallthru
      _
    %p60 = scmp.eq.s32.totalorder 0, 0
    // Predicated region
    $region34: #{tpu_custom_call.1} parent=1 // pred_check
      %p61 = pneg %p60
    $region35: #{tpu_custom_call.1} parent=1 // pred_check_branch
      %63 = sbr.rel (%p61) target = $region37
    $region36: #{tpu_custom_call.1} parent=1 // pred_region
      %64 = vst [vmem:[#allocation2] sm:$0xff] 0.0
    $region37: #{tpu_custom_call.1} parent=1 // pred_fallthru
      _
    %v65 = vld [vmem:[#allocation2] sm:$0xff]
    %v66 = vld [vmem:[#allocation3] sm:$0xff]
    %v67 = vld [vmem:[#allocation3 + $0x8] sm:$0xff]
    %v68 = vld [vmem:[#allocation3 + $0x10] sm:$0xff]
    %v69 = vld [vmem:[#allocation3 + $0x18] sm:$0xff]
    %v70 = vld [vmem:[#allocation3 + $0x20] sm:$0xff]
    %v71 = vld [vmem:[#allocation3 + $0x28] sm:$0xff]
    %v72 = vld [vmem:[#allocation3 + $0x30] sm:$0xff]
    %v73 = vld [vmem:[#allocation3 + $0x38] sm:$0xff]
    %v74 = vld [vmem:[#allocation6] sm:$0xff]
    %v75 = vld [vmem:[#allocation6 + $0x8] sm:$0xff]
    %v76 = vld [vmem:[#allocation6 + $0x10] sm:$0xff]
    %v77 = vld [vmem:[#allocation6 + $0x18] sm:$0xff]
    %v78 = vld [vmem:[#allocation6 + $0x20] sm:$0xff]
    %v79 = vld [vmem:[#allocation6 + $0x28] sm:$0xff]
    %v80 = vld [vmem:[#allocation6 + $0x30] sm:$0xff]
    %v81 = vld [vmem:[#allocation6 + $0x38] sm:$0xff]
    %v82 = vld [vmem:[#allocation6 + $0x40] sm:$0xff]
    %v83 = vld [vmem:[#allocation6 + $0x48] sm:$0xff]
    %v84 = vld [vmem:[#allocation6 + $0x50] sm:$0xff]
    %v85 = vld [vmem:[#allocation6 + $0x58] sm:$0xff]
    %v86 = vld [vmem:[#allocation6 + $0x60] sm:$0xff]
    %v87 = vld [vmem:[#allocation6 + $0x68] sm:$0xff]
    %v88 = vld [vmem:[#allocation6 + $0x70] sm:$0xff]
    %v89 = vld [vmem:[#allocation6 + $0x78] sm:$0xff]
    %v90 = vld [vmem:[#allocation6 + $0x80] sm:$0xff]
    %v91 = vld [vmem:[#allocation6 + $0x88] sm:$0xff]
    %v92 = vld [vmem:[#allocation6 + $0x90] sm:$0xff]
    %v93 = vld [vmem:[#allocation6 + $0x98] sm:$0xff]
    %v94 = vld [vmem:[#allocation6 + $0xa0] sm:$0xff]
    %v95 = vld [vmem:[#allocation6 + $0xa8] sm:$0xff]
    %v96 = vld [vmem:[#allocation6 + $0xb0] sm:$0xff]
    %v97 = vld [vmem:[#allocation6 + $0xb8] sm:$0xff]
    %v98 = vld [vmem:[#allocation6 + $0xc0] sm:$0xff]
    %v99 = vld [vmem:[#allocation6 + $0xc8] sm:$0xff]
    %v100 = vld [vmem:[#allocation6 + $0xd0] sm:$0xff]
    %v101 = vld [vmem:[#allocation6 + $0xd8] sm:$0xff]
    %v102 = vld [vmem:[#allocation6 + $0xe0] sm:$0xff]
    %v103 = vld [vmem:[#allocation6 + $0xe8] sm:$0xff]
    %v104 = vld [vmem:[#allocation6 + $0xf0] sm:$0xff]
    %v105 = vld [vmem:[#allocation6 + $0xf8] sm:$0xff]
    %v106 = vld [vmem:[#allocation6 + $0x100] sm:$0xff]
    %v107 = vld [vmem:[#allocation6 + $0x108] sm:$0xff]
    %v108 = vld [vmem:[#allocation6 + $0x110] sm:$0xff]
    %v109 = vld [vmem:[#allocation6 + $0x118] sm:$0xff]
    %v110 = vld [vmem:[#allocation6 + $0x120] sm:$0xff]
    %v111 = vld [vmem:[#allocation6 + $0x128] sm:$0xff]
    %v112 = vld [vmem:[#allocation6 + $0x130] sm:$0xff]
    %v113 = vld [vmem:[#allocation6 + $0x138] sm:$0xff]
    %v114 = vld [vmem:[#allocation6 + $0x140] sm:$0xff]
    %v115 = vld [vmem:[#allocation6 + $0x148] sm:$0xff]
    %v116 = vld [vmem:[#allocation6 + $0x150] sm:$0xff]
    %v117 = vld [vmem:[#allocation6 + $0x158] sm:$0xff]
    %v118 = vld [vmem:[#allocation6 + $0x160] sm:$0xff]
    %v119 = vld [vmem:[#allocation6 + $0x168] sm:$0xff]
    %v120 = vld [vmem:[#allocation6 + $0x170] sm:$0xff]
    %v121 = vld [vmem:[#allocation6 + $0x178] sm:$0xff]
    %v122 = vld [vmem:[#allocation6 + $0x180] sm:$0xff]
    %v123 = vld [vmem:[#allocation6 + $0x188] sm:$0xff]
    %v124 = vld [vmem:[#allocation6 + $0x190] sm:$0xff]
    %v125 = vld [vmem:[#allocation6 + $0x198] sm:$0xff]
    %v126 = vld [vmem:[#allocation6 + $0x1a0] sm:$0xff]
    %v127 = vld [vmem:[#allocation6 + $0x1a8] sm:$0xff]
    %v128 = vld [vmem:[#allocation6 + $0x1b0] sm:$0xff]
    %v129 = vld [vmem:[#allocation6 + $0x1b8] sm:$0xff]
    %v130 = vld [vmem:[#allocation6 + $0x1c0] sm:$0xff]
    %v131 = vld [vmem:[#allocation6 + $0x1c8] sm:$0xff]
    %v132 = vld [vmem:[#allocation6 + $0x1d0] sm:$0xff]
    %v133 = vld [vmem:[#allocation6 + $0x1d8] sm:$0xff]
    %v134 = vld [vmem:[#allocation6 + $0x1e0] sm:$0xff]
    %v135 = vld [vmem:[#allocation6 + $0x1e8] sm:$0xff]
    %v136 = vld [vmem:[#allocation6 + $0x1f0] sm:$0xff]
    %v137 = vld [vmem:[#allocation6 + $0x1f8] sm:$0xff]
    %v138 = vld [vmem:[#allocation6 + $0x200] sm:$0xff]
    %v139 = vld [vmem:[#allocation6 + $0x208] sm:$0xff]
    %v140 = vld [vmem:[#allocation6 + $0x210] sm:$0xff]
    %v141 = vld [vmem:[#allocation6 + $0x218] sm:$0xff]
    %v142 = vld [vmem:[#allocation6 + $0x220] sm:$0xff]
    %v143 = vld [vmem:[#allocation6 + $0x228] sm:$0xff]
    %v144 = vld [vmem:[#allocation6 + $0x230] sm:$0xff]
    %v145 = vld [vmem:[#allocation6 + $0x238] sm:$0xff]
    %v146 = vld [vmem:[#allocation6 + $0x240] sm:$0xff]
    %v147 = vld [vmem:[#allocation6 + $0x248] sm:$0xff]
    %v148 = vld [vmem:[#allocation6 + $0x250] sm:$0xff]
    %v149 = vld [vmem:[#allocation6 + $0x258] sm:$0xff]
    %v150 = vld [vmem:[#allocation6 + $0x260] sm:$0xff]
    %v151 = vld [vmem:[#allocation6 + $0x268] sm:$0xff]
    %v152 = vld [vmem:[#allocation6 + $0x270] sm:$0xff]
    %v153 = vld [vmem:[#allocation6 + $0x278] sm:$0xff]
    %v154 = vld [vmem:[#allocation6 + $0x280] sm:$0xff]
    %v155 = vld [vmem:[#allocation6 + $0x288] sm:$0xff]
    %v156 = vld [vmem:[#allocation6 + $0x290] sm:$0xff]
    %v157 = vld [vmem:[#allocation6 + $0x298] sm:$0xff]
    %v158 = vld [vmem:[#allocation6 + $0x2a0] sm:$0xff]
    %v159 = vld [vmem:[#allocation6 + $0x2a8] sm:$0xff]
    %v160 = vld [vmem:[#allocation6 + $0x2b0] sm:$0xff]
    %v161 = vld [vmem:[#allocation6 + $0x2b8] sm:$0xff]
    %v162 = vld [vmem:[#allocation6 + $0x2c0] sm:$0xff]
    %v163 = vld [vmem:[#allocation6 + $0x2c8] sm:$0xff]
    %v164 = vld [vmem:[#allocation6 + $0x2d0] sm:$0xff]
    %v165 = vld [vmem:[#allocation6 + $0x2d8] sm:$0xff]
    %v166 = vld [vmem:[#allocation6 + $0x2e0] sm:$0xff]
    %v167 = vld [vmem:[#allocation6 + $0x2e8] sm:$0xff]
    %v168 = vld [vmem:[#allocation6 + $0x2f0] sm:$0xff]
    %v169 = vld [vmem:[#allocation6 + $0x2f8] sm:$0xff]
    %v170 = vld [vmem:[#allocation6 + $0x300] sm:$0xff]
    %v171 = vld [vmem:[#allocation6 + $0x308] sm:$0xff]
    %v172 = vld [vmem:[#allocation6 + $0x310] sm:$0xff]
    %v173 = vld [vmem:[#allocation6 + $0x318] sm:$0xff]
    %v174 = vld [vmem:[#allocation6 + $0x320] sm:$0xff]
    %v175 = vld [vmem:[#allocation6 + $0x328] sm:$0xff]
    %v176 = vld [vmem:[#allocation6 + $0x330] sm:$0xff]
    %v177 = vld [vmem:[#allocation6 + $0x338] sm:$0xff]
    %v178 = vld [vmem:[#allocation6 + $0x340] sm:$0xff]
    %v179 = vld [vmem:[#allocation6 + $0x348] sm:$0xff]
    %v180 = vld [vmem:[#allocation6 + $0x350] sm:$0xff]
    %v181 = vld [vmem:[#allocation6 + $0x358] sm:$0xff]
    %v182 = vld [vmem:[#allocation6 + $0x360] sm:$0xff]
    %v183 = vld [vmem:[#allocation6 + $0x368] sm:$0xff]
    %v184 = vld [vmem:[#allocation6 + $0x370] sm:$0xff]
    %v185 = vld [vmem:[#allocation6 + $0x378] sm:$0xff]
    %v186 = vld [vmem:[#allocation6 + $0x380] sm:$0xff]
    %v187 = vld [vmem:[#allocation6 + $0x388] sm:$0xff]
    %v188 = vld [vmem:[#allocation6 + $0x390] sm:$0xff]
    %v189 = vld [vmem:[#allocation6 + $0x398] sm:$0xff]
    %v190 = vld [vmem:[#allocation6 + $0x3a0] sm:$0xff]
    %v191 = vld [vmem:[#allocation6 + $0x3a8] sm:$0xff]
    %v192 = vld [vmem:[#allocation6 + $0x3b0] sm:$0xff]
    %v193 = vld [vmem:[#allocation6 + $0x3b8] sm:$0xff]
    %v194 = vld [vmem:[#allocation6 + $0x3c0] sm:$0xff]
    %v195 = vld [vmem:[#allocation6 + $0x3c8] sm:$0xff]
    %v196 = vld [vmem:[#allocation6 + $0x3d0] sm:$0xff]
    %v197 = vld [vmem:[#allocation6 + $0x3d8] sm:$0xff]
    %v198 = vld [vmem:[#allocation6 + $0x3e0] sm:$0xff]
    %v199 = vld [vmem:[#allocation6 + $0x3e8] sm:$0xff]
    %v200 = vld [vmem:[#allocation6 + $0x3f0] sm:$0xff]
    %v201 = vld [vmem:[#allocation6 + $0x3f8] sm:$0xff]
    %202 = vmatprep.subr.mxu0 0.0
    %203 = vmatpush1.msra.mxu0 %v74
    %204 = vmatprep.subr.mxu0 0.0
    %205 = vmatpush1.msra.mxu0 %v75
    %206 = vmatprep.subr.mxu0 0.0
    %207 = vmatpush1.msra.mxu0 %v76
    %208 = vmatprep.subr.mxu0 0.0
    %209 = vmatpush1.msra.mxu0 %v77
    %210 = vmatprep.subr.mxu0 0.0
    %211 = vmatpush1.msra.mxu0 %v78
    %212 = vmatprep.subr.mxu0 0.0
    %213 = vmatpush1.msra.mxu0 %v79
    %214 = vmatprep.subr.mxu0 0.0
    %215 = vmatpush1.msra.mxu0 %v80
    %216 = vmatprep.subr.mxu0 0.0
    %217 = vmatpush1.msra.mxu0 %v81
    %218 = vmatprep.subr.mxu0 0.0
    %219 = vmatpush1.msra.mxu0 %v82
    %220 = vmatprep.subr.mxu0 0.0
    %221 = vmatpush1.msra.mxu0 %v83
    %222 = vmatprep.subr.mxu0 0.0
    %223 = vmatpush1.msra.mxu0 %v84
    %224 = vmatprep.subr.mxu0 0.0
    %225 = vmatpush1.msra.mxu0 %v85
    %226 = vmatprep.subr.mxu0 0.0
    %227 = vmatpush1.msra.mxu0 %v86
    %228 = vmatprep.subr.mxu0 0.0
    %229 = vmatpush1.msra.mxu0 %v87
    %230 = vmatprep.subr.mxu0 0.0
    %231 = vmatpush1.msra.mxu0 %v88
    %232 = vmatprep.subr.mxu0 0.0
    %233 = vmatpush1.msra.mxu0 %v89
    %234 = vmatprep.subr.mxu0 0.0
    %235 = vmatpush1.msra.mxu0 %v90
    %236 = vmatprep.subr.mxu0 0.0
    %237 = vmatpush1.msra.mxu0 %v91
    %238 = vmatprep.subr.mxu0 0.0
    %239 = vmatpush1.msra.mxu0 %v92
    %240 = vmatprep.subr.mxu0 0.0
    %241 = vmatpush1.msra.mxu0 %v93
    %242 = vmatprep.subr.mxu0 0.0
    %243 = vmatpush1.msra.mxu0 %v94
    %244 = vmatprep.subr.mxu0 0.0
    %245 = vmatpush1.msra.mxu0 %v95
    %246 = vmatprep.subr.mxu0 0.0
    %247 = vmatpush1.msra.mxu0 %v96
    %248 = vmatprep.subr.mxu0 0.0
    %249 = vmatpush1.msra.mxu0 %v97
    %250 = vmatprep.subr.mxu0 0.0
    %251 = vmatpush1.msra.mxu0 %v98
    %252 = vmatprep.subr.mxu0 0.0
    %253 = vmatpush1.msra.mxu0 %v99
    %254 = vmatprep.subr.mxu0 0.0
    %255 = vmatpush1.msra.mxu0 %v100
    %256 = vmatprep.subr.mxu0 0.0
    %257 = vmatpush1.msra.mxu0 %v101
    %258 = vmatprep.subr.mxu0 0.0
    %259 = vmatpush1.msra.mxu0 %v102
    %260 = vmatprep.subr.mxu0 0.0
    %261 = vmatpush1.msra.mxu0 %v103
    %262 = vmatprep.subr.mxu0 0.0
    %263 = vmatpush1.msra.mxu0 %v104
    %264 = vmatprep.subr.mxu0 0.0
    %265 = vmatpush1.msra.mxu0 %v105
    %266 = vmatprep.mubr.f32.mxu0 %v67
    %267 = vmatmul.mubr.f32.gmra.mrb[0].mxu0 %v66
    %v268 = vpop.f32.mrb[0].mxu0
    %v269 = vadd.f32 0.0, %v268
    %v270 = vpop.f32.mrb[0].mxu0
    %271 = vdwg.mxu0
    %272 = vmatprep.subr.mxu0 0.0
    %273 = vmatpush1.msra.mxu0 %v106
    %274 = vmatprep.subr.mxu0 0.0
    %275 = vmatpush1.msra.mxu0 %v107
    %276 = vmatprep.subr.mxu0 0.0
    %277 = vmatpush1.msra.mxu0 %v108
    %278 = vmatprep.subr.mxu0 0.0
    %279 = vmatpush1.msra.mxu0 %v109
    %280 = vmatprep.subr.mxu0 0.0
    %281 = vmatpush1.msra.mxu0 %v110
    %282 = vmatprep.subr.mxu0 0.0
    %283 = vmatpush1.msra.mxu0 %v111
    %284 = vmatprep.subr.mxu0 0.0
    %285 = vmatpush1.msra.mxu0 %v112
    %286 = vmatprep.subr.mxu0 0.0
    %287 = vmatpush1.msra.mxu0 %v113
    %288 = vmatprep.subr.mxu0 0.0
    %289 = vmatpush1.msra.mxu0 %v114
    %290 = vmatprep.subr.mxu0 0.0
    %291 = vmatpush1.msra.mxu0 %v115
    %292 = vmatprep.subr.mxu0 0.0
    %293 = vmatpush1.msra.mxu0 %v116
    %294 = vmatprep.subr.mxu0 0.0
    %295 = vmatpush1.msra.mxu0 %v117
    %296 = vmatprep.subr.mxu0 0.0
    %297 = vmatpush1.msra.mxu0 %v118
    %298 = vmatprep.subr.mxu0 0.0
    %299 = vmatpush1.msra.mxu0 %v119
    %300 = vmatprep.subr.mxu0 0.0
    %301 = vmatpush1.msra.mxu0 %v120
    %302 = vmatprep.subr.mxu0 0.0
    %303 = vmatpush1.msra.mxu0 %v121
    %304 = vmatprep.subr.mxu0 0.0
    %305 = vmatpush1.msra.mxu0 %v122
    %306 = vmatprep.subr.mxu0 0.0
    %307 = vmatpush1.msra.mxu0 %v123
    %308 = vmatprep.subr.mxu0 0.0
    %309 = vmatpush1.msra.mxu0 %v124
    %310 = vmatprep.subr.mxu0 0.0
    %311 = vmatpush1.msra.mxu0 %v125
    %312 = vmatprep.subr.mxu0 0.0
    %313 = vmatpush1.msra.mxu0 %v126
    %314 = vmatprep.subr.mxu0 0.0
    %315 = vmatpush1.msra.mxu0 %v127
    %316 = vmatprep.subr.mxu0 0.0
    %317 = vmatpush1.msra.mxu0 %v128
    %318 = vmatprep.subr.mxu0 0.0
    %319 = vmatpush1.msra.mxu0 %v129
    %320 = vmatprep.subr.mxu0 0.0
    %321 = vmatpush1.msra.mxu0 %v130
    %322 = vmatprep.subr.mxu0 0.0
    %323 = vmatpush1.msra.mxu0 %v131
    %324 = vmatprep.subr.mxu0 0.0
    %325 = vmatpush1.msra.mxu0 %v132
    %326 = vmatprep.subr.mxu0 0.0
    %327 = vmatpush1.msra.mxu0 %v133
    %328 = vmatprep.subr.mxu0 0.0
    %329 = vmatpush1.msra.mxu0 %v134
    %330 = vmatprep.subr.mxu0 0.0
    %331 = vmatpush1.msra.mxu0 %v135
    %332 = vmatprep.subr.mxu0 0.0
    %333 = vmatpush1.msra.mxu0 %v136
    %334 = vmatprep.subr.mxu0 0.0
    %335 = vmatpush1.msra.mxu0 %v137
    %336 = vmatprep.mubr.f32.mxu0 %v69
    %337 = vmatmul.mubr.f32.gmra.mrb[0].mxu0 %v68
    %v338 = vpop.f32.mrb[0].mxu0
    %v339 = vadd.f32 %v269, %v338
    %v340 = vpop.f32.mrb[0].mxu0
    %341 = vdwg.mxu0
    %342 = vmatprep.subr.mxu0 0.0
    %343 = vmatpush1.msra.mxu0 %v138
    %344 = vmatprep.subr.mxu0 0.0
    %345 = vmatpush1.msra.mxu0 %v139
    %346 = vmatprep.subr.mxu0 0.0
    %347 = vmatpush1.msra.mxu0 %v140
    %348 = vmatprep.subr.mxu0 0.0
    %349 = vmatpush1.msra.mxu0 %v141
    %350 = vmatprep.subr.mxu0 0.0
    %351 = vmatpush1.msra.mxu0 %v142
    %352 = vmatprep.subr.mxu0 0.0
    %353 = vmatpush1.msra.mxu0 %v143
    %354 = vmatprep.subr.mxu0 0.0
    %355 = vmatpush1.msra.mxu0 %v144
    %356 = vmatprep.subr.mxu0 0.0
    %357 = vmatpush1.msra.mxu0 %v145
    %358 = vmatprep.subr.mxu0 0.0
    %359 = vmatpush1.msra.mxu0 %v146
    %360 = vmatprep.subr.mxu0 0.0
    %361 = vmatpush1.msra.mxu0 %v147
    %362 = vmatprep.subr.mxu0 0.0
    %363 = vmatpush1.msra.mxu0 %v148
    %364 = vmatprep.subr.mxu0 0.0
    %365 = vmatpush1.msra.mxu0 %v149
    %366 = vmatprep.subr.mxu0 0.0
    %367 = vmatpush1.msra.mxu0 %v150
    %368 = vmatprep.subr.mxu0 0.0
    %369 = vmatpush1.msra.mxu0 %v151
    %370 = vmatprep.subr.mxu0 0.0
    %371 = vmatpush1.msra.mxu0 %v152
    %372 = vmatprep.subr.mxu0 0.0
    %373 = vmatpush1.msra.mxu0 %v153
    %374 = vmatprep.subr.mxu0 0.0
    %375 = vmatpush1.msra.mxu0 %v154
    %376 = vmatprep.subr.mxu0 0.0
    %377 = vmatpush1.msra.mxu0 %v155
    %378 = vmatprep.subr.mxu0 0.0
    %379 = vmatpush1.msra.mxu0 %v156
    %380 = vmatprep.subr.mxu0 0.0
    %381 = vmatpush1.msra.mxu0 %v157
    %382 = vmatprep.subr.mxu0 0.0
    %383 = vmatpush1.msra.mxu0 %v158
    %384 = vmatprep.subr.mxu0 0.0
    %385 = vmatpush1.msra.mxu0 %v159
    %386 = vmatprep.subr.mxu0 0.0
    %387 = vmatpush1.msra.mxu0 %v160
    %388 = vmatprep.subr.mxu0 0.0
    %389 = vmatpush1.msra.mxu0 %v161
    %390 = vmatprep.subr.mxu0 0.0
    %391 = vmatpush1.msra.mxu0 %v162
    %392 = vmatprep.subr.mxu0 0.0
    %393 = vmatpush1.msra.mxu0 %v163
    %394 = vmatprep.subr.mxu0 0.0
    %395 = vmatpush1.msra.mxu0 %v164
    %396 = vmatprep.subr.mxu0 0.0
    %397 = vmatpush1.msra.mxu0 %v165
    %398 = vmatprep.subr.mxu0 0.0
    %399 = vmatpush1.msra.mxu0 %v166
    %400 = vmatprep.subr.mxu0 0.0
    %401 = vmatpush1.msra.mxu0 %v167
    %402 = vmatprep.subr.mxu0 0.0
    %403 = vmatpush1.msra.mxu0 %v168
    %404 = vmatprep.subr.mxu0 0.0
    %405 = vmatpush1.msra.mxu0 %v169
    %406 = vmatprep.mubr.f32.mxu0 %v71
    %407 = vmatmul.mubr.f32.gmra.mrb[0].mxu0 %v70
    %v408 = vpop.f32.mrb[0].mxu0
    %v409 = vadd.f32 %v339, %v408
    %v410 = vpop.f32.mrb[0].mxu0
    %411 = vdwg.mxu0
    %412 = vmatprep.subr.mxu0 0.0
    %413 = vmatpush1.msra.mxu0 %v170
    %414 = vmatprep.subr.mxu0 0.0
    %415 = vmatpush1.msra.mxu0 %v171
    %416 = vmatprep.subr.mxu0 0.0
    %417 = vmatpush1.msra.mxu0 %v172
    %418 = vmatprep.subr.mxu0 0.0
    %419 = vmatpush1.msra.mxu0 %v173
    %420 = vmatprep.subr.mxu0 0.0
    %421 = vmatpush1.msra.mxu0 %v174
    %422 = vmatprep.subr.mxu0 0.0
    %423 = vmatpush1.msra.mxu0 %v175
    %424 = vmatprep.subr.mxu0 0.0
    %425 = vmatpush1.msra.mxu0 %v176
    %426 = vmatprep.subr.mxu0 0.0
    %427 = vmatpush1.msra.mxu0 %v177
    %428 = vmatprep.subr.mxu0 0.0
    %429 = vmatpush1.msra.mxu0 %v178
    %430 = vmatprep.subr.mxu0 0.0
    %431 = vmatpush1.msra.mxu0 %v179
    %432 = vmatprep.subr.mxu0 0.0
    %433 = vmatpush1.msra.mxu0 %v180
    %434 = vmatprep.subr.mxu0 0.0
    %435 = vmatpush1.msra.mxu0 %v181
    %436 = vmatprep.subr.mxu0 0.0
    %437 = vmatpush1.msra.mxu0 %v182
    %438 = vmatprep.subr.mxu0 0.0
    %439 = vmatpush1.msra.mxu0 %v183
    %440 = vmatprep.subr.mxu0 0.0
    %441 = vmatpush1.msra.mxu0 %v184
    %442 = vmatprep.subr.mxu0 0.0
    %443 = vmatpush1.msra.mxu0 %v185
    %444 = vmatprep.subr.mxu0 0.0
    %445 = vmatpush1.msra.mxu0 %v186
    %446 = vmatprep.subr.mxu0 0.0
    %447 = vmatpush1.msra.mxu0 %v187
    %448 = vmatprep.subr.mxu0 0.0
    %449 = vmatpush1.msra.mxu0 %v188
    %450 = vmatprep.subr.mxu0 0.0
    %451 = vmatpush1.msra.mxu0 %v189
    %452 = vmatprep.subr.mxu0 0.0
    %453 = vmatpush1.msra.mxu0 %v190
    %454 = vmatprep.subr.mxu0 0.0
    %455 = vmatpush1.msra.mxu0 %v191
    %456 = vmatprep.subr.mxu0 0.0
    %457 = vmatpush1.msra.mxu0 %v192
    %458 = vmatprep.subr.mxu0 0.0
    %459 = vmatpush1.msra.mxu0 %v193
    %460 = vmatprep.subr.mxu0 0.0
    %461 = vmatpush1.msra.mxu0 %v194
    %462 = vmatprep.subr.mxu0 0.0
    %463 = vmatpush1.msra.mxu0 %v195
    %464 = vmatprep.subr.mxu0 0.0
    %465 = vmatpush1.msra.mxu0 %v196
    %466 = vmatprep.subr.mxu0 0.0
    %467 = vmatpush1.msra.mxu0 %v197
    %468 = vmatprep.subr.mxu0 0.0
    %469 = vmatpush1.msra.mxu0 %v198
    %470 = vmatprep.subr.mxu0 0.0
    %471 = vmatpush1.msra.mxu0 %v199
    %472 = vmatprep.subr.mxu0 0.0
    %473 = vmatpush1.msra.mxu0 %v200
    %474 = vmatprep.subr.mxu0 0.0
    %475 = vmatpush1.msra.mxu0 %v201
    %476 = vmatprep.mubr.f32.mxu0 %v73
    %477 = vmatmul.mubr.f32.gmra.mrb[0].mxu0 %v72
    %v478 = vpop.f32.mrb[0].mxu0
    %v479 = vadd.f32 %v409, %v478
    %v480 = vpop.f32.mrb[0].mxu0
    %481 = vdwg.mxu0
    %v482 = vadd.f32 %v65, %v479
    %483 = vst [vmem:[#allocation2] sm:$0xff] %v482
    // Predicated region
    $region38: #{tpu_custom_call.1} parent=1 // pred_check
      %p484 = pneg %p60
    $region39: #{tpu_custom_call.1} parent=1 // pred_check_branch
      %486 = sbr.rel (%p484) target = $region41
    $region40: #{tpu_custom_call.1} parent=1 // pred_region
      %v487 = vld [vmem:[#allocation2] sm:$0xff]
      %v488 = vld [vmem:[%s2] sm:$0x1]
      %v490 = vlaneseq
      %v491 = vshrl.u32 %v490, 7
      %v492 = vsub.s32 0, %v491
      %v493 = vrot.slane %v488, %v492
      %v495 = vadd.f32 %v487, %v493
      %v496 = vmax.f32 %v495, 0.0
      %v497 = vld [vmem:[#allocation8] sm:$0xff]
      %v498 = vld [vmem:[#allocation8 + $0x8] sm:$0xff]
      %v499 = vld [vmem:[#allocation8 + $0x10] sm:$0xff]
      %v500 = vld [vmem:[#allocation8 + $0x18] sm:$0xff]
      %v501 = vld [vmem:[#allocation8 + $0x20] sm:$0xff]
      %v502 = vld [vmem:[#allocation8 + $0x28] sm:$0xff]
      %v503 = vld [vmem:[#allocation8 + $0x30] sm:$0xff]
      %v504 = vld [vmem:[#allocation8 + $0x38] sm:$0xff]
      %v505 = vld [vmem:[#allocation8 + $0x40] sm:$0xff]
      %v506 = vld [vmem:[#allocation8 + $0x48] sm:$0xff]
      %v507 = vld [vmem:[#allocation8 + $0x50] sm:$0xff]
      %v508 = vld [vmem:[#allocation8 + $0x58] sm:$0xff]
      %v509 = vld [vmem:[#allocation8 + $0x60] sm:$0xff]
      %v510 = vld [vmem:[#allocation8 + $0x68] sm:$0xff]
      %v511 = vld [vmem:[#allocation8 + $0x70] sm:$0xff]
      %v512 = vld [vmem:[#allocation8 + $0x78] sm:$0xff]
      %v513 = vld [vmem:[%s4] sm:$0x1]
      %v515 = vlaneseq
      %v516 = vshrl.u32 %v515, 7
      %v517 = vsub.s32 0, %v516
      %v518 = vrot.slane %v513, %v517
      %520 = vmatprep.subr.mxu0 0.0
      %521 = vmatpush1.msra.mxu0 %v497
      %522 = vmatprep.subr.mxu0 0.0
      %523 = vmatpush1.msra.mxu0 %v498
      %524 = vmatprep.subr.mxu0 0.0
      %525 = vmatpush1.msra.mxu0 %v499
      %526 = vmatprep.subr.mxu0 0.0
      %527 = vmatpush1.msra.mxu0 %v500
      %528 = vmatprep.subr.mxu0 0.0
      %529 = vmatpush1.msra.mxu0 %v501
      %530 = vmatprep.subr.mxu0 0.0
      %531 = vmatpush1.msra.mxu0 %v502
      %532 = vmatprep.subr.mxu0 0.0
      %533 = vmatpush1.msra.mxu0 %v503
      %534 = vmatprep.subr.mxu0 0.0
      %535 = vmatpush1.msra.mxu0 %v504
      %536 = vmatprep.subr.mxu0 0.0
      %537 = vmatpush1.msra.mxu0 %v505
      %538 = vmatprep.subr.mxu0 0.0
      %539 = vmatpush1.msra.mxu0 %v506
      %540 = vmatprep.subr.mxu0 0.0
      %541 = vmatpush1.msra.mxu0 %v507
      %542 = vmatprep.subr.mxu0 0.0
      %543 = vmatpush1.msra.mxu0 %v508
      %544 = vmatprep.subr.mxu0 0.0
      %545 = vmatpush1.msra.mxu0 %v509
      %546 = vmatprep.subr.mxu0 0.0
      %547 = vmatpush1.msra.mxu0 %v510
      %548 = vmatprep.subr.mxu0 0.0
      %549 = vmatpush1.msra.mxu0 %v511
      %550 = vmatprep.subr.mxu0 0.0
      %551 = vmatpush1.msra.mxu0 %v512
      %552 = vmatprep.subr.mxu0 0.0
      %553 = vmatpush1.msra.mxu0 0.0
      %554 = vmatprep.subr.mxu0 0.0
      %555 = vmatpush1.msra.mxu0 0.0
      %556 = vmatprep.subr.mxu0 0.0
      %557 = vmatpush1.msra.mxu0 0.0
      %558 = vmatprep.subr.mxu0 0.0
      %559 = vmatpush1.msra.mxu0 0.0
      %560 = vmatprep.subr.mxu0 0.0
      %561 = vmatpush1.msra.mxu0 0.0
      %562 = vmatprep.subr.mxu0 0.0
      %563 = vmatpush1.msra.mxu0 0.0
      %564 = vmatprep.subr.mxu0 0.0
      %565 = vmatpush1.msra.mxu0 0.0
      %566 = vmatprep.subr.mxu0 0.0
      %567 = vmatpush1.msra.mxu0 0.0
      %568 = vmatprep.subr.mxu0 0.0
      %569 = vmatpush1.msra.mxu0 0.0
      %570 = vmatprep.subr.mxu0 0.0
      %571 = vmatpush1.msra.mxu0 0.0
      %572 = vmatprep.subr.mxu0 0.0
      %573 = vmatpush1.msra.mxu0 0.0
      %574 = vmatprep.subr.mxu0 0.0
      %575 = vmatpush1.msra.mxu0 0.0
      %576 = vmatprep.subr.mxu0 0.0
      %577 = vmatpush1.msra.mxu0 0.0
      %578 = vmatprep.subr.mxu0 0.0
      %579 = vmatpush1.msra.mxu0 0.0
      %580 = vmatprep.subr.mxu0 0.0
      %581 = vmatpush1.msra.mxu0 0.0
      %582 = vmatprep.subr.mxu0 0.0
      %583 = vmatpush1.msra.mxu0 0.0
      %584 = vmatprep.mubr.f32.mxu0 0.0
      %585 = vmatmul.mubr.f32.gmra.mrb[0].mxu0 %v496
      %v586 = vpop.f32.mrb[0].mxu0
      %v587 = vadd.f32 %v518, %v586
      %v588 = vpop.f32.mrb[0].mxu0
      %589 = vdwg.mxu0
      %590 = vst [vmem:[#allocation9] sm:$0xff] %v587
    $region41: #{tpu_custom_call.1} parent=1 // pred_fallthru
      _
    // Predicated region
    $region42: #{tpu_custom_call.1} parent=1 // pred_check
      _
    $region43: #{tpu_custom_call.1} parent=1 // pred_check_branch
      %592 = sbr.rel (0) target = $region45
    $region44: #{tpu_custom_call.1} parent=1 // pred_region
      %s594 = ssub.s32 128, 128
      %595 = vsyncadd [#allocation5], %s594
      %s597 = sshll.u32 [#allocation9], 4
      %s598 = int_to_ptr.vmem [resolvable:$true] %s597
      %600 = dma.vmem_to_hbm [thread:$0]  %s598, 128, %s5, [#allocation5]
    $region45: #{tpu_custom_call.1} parent=1 // pred_fallthru
      _
    // Predicated region
    $region46: #{tpu_custom_call.1} parent=1 // pred_check
      _
    $region47: #{tpu_custom_call.1} parent=1 // pred_check_branch
      %602 = sbr.rel (0) target = $region49
    $region48: #{tpu_custom_call.1} parent=1 // pred_region
      %603 = dma.done [#allocation5], 128
    $region49: #{tpu_custom_call.1} parent=1 // pred_fallthru
      _
    %604 = vsyncpa [#allocation4], 1
    %605 = vsyncpa [#allocation7], 1
    %606 = vsyncpa [#allocation5], 1

// kernel: tpu_custom_call.1
$region0: #{tpu_custom_call.1}
  #allocation0 [shape = 'u32[]', space=smem, size = 0x4, offset = 0x4, fixed_abs, tag = 'smem constant byte address 0x4 - core index']
  #allocation1 [shape = 'u32[144,128]{1,0:T(1,128)}', space=vmem, size = 0x12000, scoped, tag = 'internal scratch']
  #allocation2 [shape = 'f32[8,128]{1,0:T(8,128)}', space=vmem, size = 0x1000, scoped, tag = 'scratch operand']
  %s0 = inlined_call_operand.hbm [shape: f32[8,1024], index: 0, kind: input, shape index: {}]
  %s1 = inlined_call_operand.hbm [shape: f32[1024,128], index: 1, kind: input, shape index: {}]
  %s2 = inlined_call_operand.vmem [shape: f32[1,128], index: 2, kind: input, shape index: {}]
  %s3 = inlined_call_operand.hbm [shape: f32[128,128], index: 3, kind: input, shape index: {}]
  %s4 = inlined_call_operand.vmem [shape: f32[1,128], index: 4, kind: input, shape index: {}]
  %s5 = inlined_call_operand.hbm [shape: f32[8,128], index: 5, kind: output, shape index: {}]
  %s6 = sld [smem:[#allocation0]]
  $region50: #{tpu_custom_call.1} parent=0
    _
  %s8 = ssub.s32 1, %s6
  %s9 = scalar_select 0, %s8, %s6
  $region1: #{tpu_custom_call.1} parent=0
    #allocation3 [shape = 'u8[32768]{0}', space=vmem, size = 0x8000, scoped, tag = 'input window, operand 0, single buffered']
    #allocation4 [shape = 's32[1]{0}', space=sflag, size = 0x4, scoped, tag = 'scoped memory for tpu_custom_call.1']
    #allocation5 [shape = 's32[1]{0}', space=sflag, size = 0x4, scoped, tag = 'scoped memory for tpu_custom_call.1']
    #allocation6 [shape = 'u8[524288]{0}', space=vmem, size = 0x80000, scoped, tag = 'input window, operand 1, single buffered']
    #allocation7 [shape = 's32[1]{0}', space=sflag, size = 0x4, scoped, tag = 'scoped memory for tpu_custom_call.1']
    #allocation8 [shape = 'u8[65536]{0}', space=vmem, size = 0x10000, scoped, tag = 'input window, operand 3, single buffered']
    #allocation9 [shape = 'u8[4096]{0}', space=vmem, size = 0x1000, scoped, tag = 'output window, operand 0, single buffered']
    %10 = vsyncpa [#allocation4], 0
    %11 = vsyncpa [#allocation7], 0
    %12 = vsyncpa [#allocation5], 0
    // Predicated region
    $region2: #{tpu_custom_call.1} parent=1 // pred_check
      _
    $region3: #{tpu_custom_call.1} parent=1 // pred_check_branch
      %14 = sbr.rel (0) target = $region5
    $region4: #{tpu_custom_call.1} parent=1 // pred_region
      %s16 = ssub.s32 1024, 1024
      %17 = vsyncadd [#allocation4], %s16
      %s19 = sshll.u32 [#allocation3], 4
      %s20 = int_to_ptr.vmem [resolvable:$true] %s19
      %22 = dma.hbm_to_vmem [thread:$0]  %s0, 1024, %s20, [#allocation4]
    $region5: #{tpu_custom_call.1} parent=1 // pred_fallthru
      _
    // Predicated region
    $region6: #{tpu_custom_call.1} parent=1 // pred_check
      _
    $region7: #{tpu_custom_call.1} parent=1 // pred_check_branch
      %24 = sbr.rel (0) target = $region9
    $region8: #{tpu_custom_call.1} parent=1 // pred_region
      %s26 = ssub.s32 16384, 16384
      %27 = vsyncadd [#allocation7], %s26
      %s28 = sshll.u32 [#allocation6], 4
      %s29 = int_to_ptr.vmem [resolvable:$true] %s28
      %34 = dma.hbm_to_vmem [thread:$0]  %s1, 16384, %s29, [#allocation7], 128, 128, 8
    $region9: #{tpu_custom_call.1} parent=1 // pred_fallthru
      _
    // Predicated region
    $region10: #{tpu_custom_call.1} parent=1 // pred_check
      _
    $region11: #{tpu_custom_call.1} parent=1 // pred_check_branch
      %36 = sbr.rel (0) target = $region13
    $region12: #{tpu_custom_call.1} parent=1 // pred_region
      _
    $region13: #{tpu_custom_call.1} parent=1 // pred_fallthru
      _
    // Predicated region
    $region14: #{tpu_custom_call.1} parent=1 // pred_check
      _
    $region15: #{tpu_custom_call.1} parent=1 // pred_check_branch
      %38 = sbr.rel (0) target = $region17
    $region16: #{tpu_custom_call.1} parent=1 // pred_region
      %s40 = ssub.s32 2048, 2048
      %41 = vsyncadd [#allocation7], %s40
      %s42 = sshll.u32 [#allocation8], 4
      %s43 = int_to_ptr.vmem [resolvable:$true] %s42
      %48 = dma.hbm_to_vmem [thread:$0]  %s3, 2048, %s43, [#allocation7], 128, 128, 8
    $region17: #{tpu_custom_call.1} parent=1 // pred_fallthru
      _
    // Predicated region
    $region18: #{tpu_custom_call.1} parent=1 // pred_check
      _
    $region19: #{tpu_custom_call.1} parent=1 // pred_check_branch
      %50 = sbr.rel (0) target = $region21
    $region20: #{tpu_custom_call.1} parent=1 // pred_region
      _
    $region21: #{tpu_custom_call.1} parent=1 // pred_fallthru
      _
    // Predicated region
    $region22: #{tpu_custom_call.1} parent=1 // pred_check
      _
    $region23: #{tpu_custom_call.1} parent=1 // pred_check_branch
      %52 = sbr.rel (0) target = $region25
    $region24: #{tpu_custom_call.1} parent=1 // pred_region
      %53 = dma.done [#allocation4], 1024
    $region25: #{tpu_custom_call.1} parent=1 // pred_fallthru
      _
    // Predicated region
    $region26: #{tpu_custom_call.1} parent=1 // pred_check
      _
    $region27: #{tpu_custom_call.1} parent=1 // pred_check_branch
      %55 = sbr.rel (0) target = $region29
    $region28: #{tpu_custom_call.1} parent=1 // pred_region
      %56 = dma.done [#allocation7], 16384
    $region29: #{tpu_custom_call.1} parent=1 // pred_fallthru
      _
    // Predicated region
    $region30: #{tpu_custom_call.1} parent=1 // pred_check
      _
    $region31: #{tpu_custom_call.1} parent=1 // pred_check_branch
      %58 = sbr.rel (0) target = $region33
    $region32: #{tpu_custom_call.1} parent=1 // pred_region
      %59 = dma.done [#allocation7], 2048
    $region33: #{tpu_custom_call.1} parent=1 // pred_fallthru
      _
    %p60 = scmp.eq.s32.totalorder 0, 0
    // Predicated region
    $region34: #{tpu_custom_call.1} parent=1 // pred_check
      %p61 = pneg %p60
    $region35: #{tpu_custom_call.1} parent=1 // pred_check_branch
      %63 = sbr.rel (%p61) target = $region37
    $region36: #{tpu_custom_call.1} parent=1 // pred_region
      %64 = vst [vmem:[#allocation2] sm:$0xff] 0.0
    $region37: #{tpu_custom_call.1} parent=1 // pred_fallthru
      _
    %v65 = vld [vmem:[#allocation2] sm:$0xff]
    %v66 = vld [vmem:[#allocation3] sm:$0xff]
    %v67 = vld [vmem:[#allocation3 + $0x8] sm:$0xff]
    %v68 = vld [vmem:[#allocation3 + $0x10] sm:$0xff]
    %v69 = vld [vmem:[#allocation3 + $0x18] sm:$0xff]
    %v70 = vld [vmem:[#allocation3 + $0x20] sm:$0xff]
    %v71 = vld [vmem:[#allocation3 + $0x28] sm:$0xff]
    %v72 = vld [vmem:[#allocation3 + $0x30] sm:$0xff]
    %v73 = vld [vmem:[#allocation3 + $0x38] sm:$0xff]
    %v74 = vld [vmem:[#allocation6] sm:$0xff]
    %v75 = vld [vmem:[#allocation6 + $0x8] sm:$0xff]
    %v76 = vld [vmem:[#allocation6 + $0x10] sm:$0xff]
    %v77 = vld [vmem:[#allocation6 + $0x18] sm:$0xff]
    %v78 = vld [vmem:[#allocation6 + $0x20] sm:$0xff]
    %v79 = vld [vmem:[#allocation6 + $0x28] sm:$0xff]
    %v80 = vld [vmem:[#allocation6 + $0x30] sm:$0xff]
    %v81 = vld [vmem:[#allocation6 + $0x38] sm:$0xff]
    %v82 = vld [vmem:[#allocation6 + $0x40] sm:$0xff]
    %v83 = vld [vmem:[#allocation6 + $0x48] sm:$0xff]
    %v84 = vld [vmem:[#allocation6 + $0x50] sm:$0xff]
    %v85 = vld [vmem:[#allocation6 + $0x58] sm:$0xff]
    %v86 = vld [vmem:[#allocation6 + $0x60] sm:$0xff]
    %v87 = vld [vmem:[#allocation6 + $0x68] sm:$0xff]
    %v88 = vld [vmem:[#allocation6 + $0x70] sm:$0xff]
    %v89 = vld [vmem:[#allocation6 + $0x78] sm:$0xff]
    %v90 = vld [vmem:[#allocation6 + $0x80] sm:$0xff]
    %v91 = vld [vmem:[#allocation6 + $0x88] sm:$0xff]
    %v92 = vld [vmem:[#allocation6 + $0x90] sm:$0xff]
    %v93 = vld [vmem:[#allocation6 + $0x98] sm:$0xff]
    %v94 = vld [vmem:[#allocation6 + $0xa0] sm:$0xff]
    %v95 = vld [vmem:[#allocation6 + $0xa8] sm:$0xff]
    %v96 = vld [vmem:[#allocation6 + $0xb0] sm:$0xff]
    %v97 = vld [vmem:[#allocation6 + $0xb8] sm:$0xff]
    %v98 = vld [vmem:[#allocation6 + $0xc0] sm:$0xff]
    %v99 = vld [vmem:[#allocation6 + $0xc8] sm:$0xff]
    %v100 = vld [vmem:[#allocation6 + $0xd0] sm:$0xff]
    %v101 = vld [vmem:[#allocation6 + $0xd8] sm:$0xff]
    %v102 = vld [vmem:[#allocation6 + $0xe0] sm:$0xff]
    %v103 = vld [vmem:[#allocation6 + $0xe8] sm:$0xff]
    %v104 = vld [vmem:[#allocation6 + $0xf0] sm:$0xff]
    %v105 = vld [vmem:[#allocation6 + $0xf8] sm:$0xff]
    %v106 = vld [vmem:[#allocation6 + $0x100] sm:$0xff]
    %v107 = vld [vmem:[#allocation6 + $0x108] sm:$0xff]
    %v108 = vld [vmem:[#allocation6 + $0x110] sm:$0xff]
    %v109 = vld [vmem:[#allocation6 + $0x118] sm:$0xff]
    %v110 = vld [vmem:[#allocation6 + $0x120] sm:$0xff]
    %v111 = vld [vmem:[#allocation6 + $0x128] sm:$0xff]
    %v112 = vld [vmem:[#allocation6 + $0x130] sm:$0xff]
    %v113 = vld [vmem:[#allocation6 + $0x138] sm:$0xff]
    %v114 = vld [vmem:[#allocation6 + $0x140] sm:$0xff]
    %v115 = vld [vmem:[#allocation6 + $0x148] sm:$0xff]
    %v116 = vld [vmem:[#allocation6 + $0x150] sm:$0xff]
    %v117 = vld [vmem:[#allocation6 + $0x158] sm:$0xff]
    %v118 = vld [vmem:[#allocation6 + $0x160] sm:$0xff]
    %v119 = vld [vmem:[#allocation6 + $0x168] sm:$0xff]
    %v120 = vld [vmem:[#allocation6 + $0x170] sm:$0xff]
    %v121 = vld [vmem:[#allocation6 + $0x178] sm:$0xff]
    %v122 = vld [vmem:[#allocation6 + $0x180] sm:$0xff]
    %v123 = vld [vmem:[#allocation6 + $0x188] sm:$0xff]
    %v124 = vld [vmem:[#allocation6 + $0x190] sm:$0xff]
    %v125 = vld [vmem:[#allocation6 + $0x198] sm:$0xff]
    %v126 = vld [vmem:[#allocation6 + $0x1a0] sm:$0xff]
    %v127 = vld [vmem:[#allocation6 + $0x1a8] sm:$0xff]
    %v128 = vld [vmem:[#allocation6 + $0x1b0] sm:$0xff]
    %v129 = vld [vmem:[#allocation6 + $0x1b8] sm:$0xff]
    %v130 = vld [vmem:[#allocation6 + $0x1c0] sm:$0xff]
    %v131 = vld [vmem:[#allocation6 + $0x1c8] sm:$0xff]
    %v132 = vld [vmem:[#allocation6 + $0x1d0] sm:$0xff]
    %v133 = vld [vmem:[#allocation6 + $0x1d8] sm:$0xff]
    %v134 = vld [vmem:[#allocation6 + $0x1e0] sm:$0xff]
    %v135 = vld [vmem:[#allocation6 + $0x1e8] sm:$0xff]
    %v136 = vld [vmem:[#allocation6 + $0x1f0] sm:$0xff]
    %v137 = vld [vmem:[#allocation6 + $0x1f8] sm:$0xff]
    %v138 = vld [vmem:[#allocation6 + $0x200] sm:$0xff]
    %v139 = vld [vmem:[#allocation6 + $0x208] sm:$0xff]
    %v140 = vld [vmem:[#allocation6 + $0x210] sm:$0xff]
    %v141 = vld [vmem:[#allocation6 + $0x218] sm:$0xff]
    %v142 = vld [vmem:[#allocation6 + $0x220] sm:$0xff]
    %v143 = vld [vmem:[#allocation6 + $0x228] sm:$0xff]
    %v144 = vld [vmem:[#allocation6 + $0x230] sm:$0xff]
    %v145 = vld [vmem:[#allocation6 + $0x238] sm:$0xff]
    %v146 = vld [vmem:[#allocation6 + $0x240] sm:$0xff]
    %v147 = vld [vmem:[#allocation6 + $0x248] sm:$0xff]
    %v148 = vld [vmem:[#allocation6 + $0x250] sm:$0xff]
    %v149 = vld [vmem:[#allocation6 + $0x258] sm:$0xff]
    %v150 = vld [vmem:[#allocation6 + $0x260] sm:$0xff]
    %v151 = vld [vmem:[#allocation6 + $0x268] sm:$0xff]
    %v152 = vld [vmem:[#allocation6 + $0x270] sm:$0xff]
    %v153 = vld [vmem:[#allocation6 + $0x278] sm:$0xff]
    %v154 = vld [vmem:[#allocation6 + $0x280] sm:$0xff]
    %v155 = vld [vmem:[#allocation6 + $0x288] sm:$0xff]
    %v156 = vld [vmem:[#allocation6 + $0x290] sm:$0xff]
    %v157 = vld [vmem:[#allocation6 + $0x298] sm:$0xff]
    %v158 = vld [vmem:[#allocation6 + $0x2a0] sm:$0xff]
    %v159 = vld [vmem:[#allocation6 + $0x2a8] sm:$0xff]
    %v160 = vld [vmem:[#allocation6 + $0x2b0] sm:$0xff]
    %v161 = vld [vmem:[#allocation6 + $0x2b8] sm:$0xff]
    %v162 = vld [vmem:[#allocation6 + $0x2c0] sm:$0xff]
    %v163 = vld [vmem:[#allocation6 + $0x2c8] sm:$0xff]
    %v164 = vld [vmem:[#allocation6 + $0x2d0] sm:$0xff]
    %v165 = vld [vmem:[#allocation6 + $0x2d8] sm:$0xff]
    %v166 = vld [vmem:[#allocation6 + $0x2e0] sm:$0xff]
    %v167 = vld [vmem:[#allocation6 + $0x2e8] sm:$0xff]
    %v168 = vld [vmem:[#allocation6 + $0x2f0] sm:$0xff]
    %v169 = vld [vmem:[#allocation6 + $0x2f8] sm:$0xff]
    %v170 = vld [vmem:[#allocation6 + $0x300] sm:$0xff]
    %v171 = vld [vmem:[#allocation6 + $0x308] sm:$0xff]
    %v172 = vld [vmem:[#allocation6 + $0x310] sm:$0xff]
    %v173 = vld [vmem:[#allocation6 + $0x318] sm:$0xff]
    %v174 = vld [vmem:[#allocation6 + $0x320] sm:$0xff]
    %v175 = vld [vmem:[#allocation6 + $0x328] sm:$0xff]
    %v176 = vld [vmem:[#allocation6 + $0x330] sm:$0xff]
    %v177 = vld [vmem:[#allocation6 + $0x338] sm:$0xff]
    %v178 = vld [vmem:[#allocation6 + $0x340] sm:$0xff]
    %v179 = vld [vmem:[#allocation6 + $0x348] sm:$0xff]
    %v180 = vld [vmem:[#allocation6 + $0x350] sm:$0xff]
    %v181 = vld [vmem:[#allocation6 + $0x358] sm:$0xff]
    %v182 = vld [vmem:[#allocation6 + $0x360] sm:$0xff]
    %v183 = vld [vmem:[#allocation6 + $0x368] sm:$0xff]
    %v184 = vld [vmem:[#allocation6 + $0x370] sm:$0xff]
    %v185 = vld [vmem:[#allocation6 + $0x378] sm:$0xff]
    %v186 = vld [vmem:[#allocation6 + $0x380] sm:$0xff]
    %v187 = vld [vmem:[#allocation6 + $0x388] sm:$0xff]
    %v188 = vld [vmem:[#allocation6 + $0x390] sm:$0xff]
    %v189 = vld [vmem:[#allocation6 + $0x398] sm:$0xff]
    %v190 = vld [vmem:[#allocation6 + $0x3a0] sm:$0xff]
    %v191 = vld [vmem:[#allocation6 + $0x3a8] sm:$0xff]
    %v192 = vld [vmem:[#allocation6 + $0x3b0] sm:$0xff]
    %v193 = vld [vmem:[#allocation6 + $0x3b8] sm:$0xff]
    %v194 = vld [vmem:[#allocation6 + $0x3c0] sm:$0xff]
    %v195 = vld [vmem:[#allocation6 + $0x3c8] sm:$0xff]
    %v196 = vld [vmem:[#allocation6 + $0x3d0] sm:$0xff]
    %v197 = vld [vmem:[#allocation6 + $0x3d8] sm:$0xff]
    %v198 = vld [vmem:[#allocation6 + $0x3e0] sm:$0xff]
    %v199 = vld [vmem:[#allocation6 + $0x3e8] sm:$0xff]
    %v200 = vld [vmem:[#allocation6 + $0x3f0] sm:$0xff]
    %v201 = vld [vmem:[#allocation6 + $0x3f8] sm:$0xff]
    %202 = vmatprep.subr.mxu0 0.0
    %203 = vmatpush1.msra.mxu0 %v74
    %204 = vmatprep.subr.mxu0 0.0
    %205 = vmatpush1.msra.mxu0 %v75
    %206 = vmatprep.subr.mxu0 0.0
    %207 = vmatpush1.msra.mxu0 %v76
    %208 = vmatprep.subr.mxu0 0.0
    %209 = vmatpush1.msra.mxu0 %v77
    %210 = vmatprep.subr.mxu0 0.0
    %211 = vmatpush1.msra.mxu0 %v78
    %212 = vmatprep.subr.mxu0 0.0
    %213 = vmatpush1.msra.mxu0 %v79
    %214 = vmatprep.subr.mxu0 0.0
    %215 = vmatpush1.msra.mxu0 %v80
    %216 = vmatprep.subr.mxu0 0.0
    %217 = vmatpush1.msra.mxu0 %v81
    %218 = vmatprep.subr.mxu0 0.0
    %219 = vmatpush1.msra.mxu0 %v82
    %220 = vmatprep.subr.mxu0 0.0
    %221 = vmatpush1.msra.mxu0 %v83
    %222 = vmatprep.subr.mxu0 0.0
    %223 = vmatpush1.msra.mxu0 %v84
    %224 = vmatprep.subr.mxu0 0.0
    %225 = vmatpush1.msra.mxu0 %v85
    %226 = vmatprep.subr.mxu0 0.0
    %227 = vmatpush1.msra.mxu0 %v86
    %228 = vmatprep.subr.mxu0 0.0
    %229 = vmatpush1.msra.mxu0 %v87
    %230 = vmatprep.subr.mxu0 0.0
    %231 = vmatpush1.msra.mxu0 %v88
    %232 = vmatprep.subr.mxu0 0.0
    %233 = vmatpush1.msra.mxu0 %v89
    %234 = vmatprep.subr.mxu0 0.0
    %235 = vmatpush1.msra.mxu0 %v90
    %236 = vmatprep.subr.mxu0 0.0
    %237 = vmatpush1.msra.mxu0 %v91
    %238 = vmatprep.subr.mxu0 0.0
    %239 = vmatpush1.msra.mxu0 %v92
    %240 = vmatprep.subr.mxu0 0.0
    %241 = vmatpush1.msra.mxu0 %v93
    %242 = vmatprep.subr.mxu0 0.0
    %243 = vmatpush1.msra.mxu0 %v94
    %244 = vmatprep.subr.mxu0 0.0
    %245 = vmatpush1.msra.mxu0 %v95
    %246 = vmatprep.subr.mxu0 0.0
    %247 = vmatpush1.msra.mxu0 %v96
    %248 = vmatprep.subr.mxu0 0.0
    %249 = vmatpush1.msra.mxu0 %v97
    %250 = vmatprep.subr.mxu0 0.0
    %251 = vmatpush1.msra.mxu0 %v98
    %252 = vmatprep.subr.mxu0 0.0
    %253 = vmatpush1.msra.mxu0 %v99
    %254 = vmatprep.subr.mxu0 0.0
    %255 = vmatpush1.msra.mxu0 %v100
    %256 = vmatprep.subr.mxu0 0.0
    %257 = vmatpush1.msra.mxu0 %v101
    %258 = vmatprep.subr.mxu0 0.0
    %259 = vmatpush1.msra.mxu0 %v102
    %260 = vmatprep.subr.mxu0 0.0
    %261 = vmatpush1.msra.mxu0 %v103
    %262 = vmatprep.subr.mxu0 0.0
    %263 = vmatpush1.msra.mxu0 %v104
    %264 = vmatprep.subr.mxu0 0.0
    %265 = vmatpush1.msra.mxu0 %v105
    %266 = vmatprep.mubr.f32.mxu0 %v67
    %267 = vmatmul.mubr.f32.gmra.mrb[0].mxu0 %v66
    %v268 = vpop.f32.mrb[0].mxu0
    %v269 = vadd.f32 0.0, %v268
    %v270 = vpop.f32.mrb[0].mxu0
    %271 = vdwg.mxu0
    %272 = vmatprep.subr.mxu0 0.0
    %273 = vmatpush1.msra.mxu0 %v106
    %274 = vmatprep.subr.mxu0 0.0
    %275 = vmatpush1.msra.mxu0 %v107
    %276 = vmatprep.subr.mxu0 0.0
    %277 = vmatpush1.msra.mxu0 %v108
    %278 = vmatprep.subr.mxu0 0.0
    %279 = vmatpush1.msra.mxu0 %v109
    %280 = vmatprep.subr.mxu0 0.0
    %281 = vmatpush1.msra.mxu0 %v110
    %282 = vmatprep.subr.mxu0 0.0
    %283 = vmatpush1.msra.mxu0 %v111
    %284 = vmatprep.subr.mxu0 0.0
    %285 = vmatpush1.msra.mxu0 %v112
    %286 = vmatprep.subr.mxu0 0.0
    %287 = vmatpush1.msra.mxu0 %v113
    %288 = vmatprep.subr.mxu0 0.0
    %289 = vmatpush1.msra.mxu0 %v114
    %290 = vmatprep.subr.mxu0 0.0
    %291 = vmatpush1.msra.mxu0 %v115
    %292 = vmatprep.subr.mxu0 0.0
    %293 = vmatpush1.msra.mxu0 %v116
    %294 = vmatprep.subr.mxu0 0.0
    %295 = vmatpush1.msra.mxu0 %v117
    %296 = vmatprep.subr.mxu0 0.0
    %297 = vmatpush1.msra.mxu0 %v118
    %298 = vmatprep.subr.mxu0 0.0
    %299 = vmatpush1.msra.mxu0 %v119
    %300 = vmatprep.subr.mxu0 0.0
    %301 = vmatpush1.msra.mxu0 %v120
    %302 = vmatprep.subr.mxu0 0.0
    %303 = vmatpush1.msra.mxu0 %v121
    %304 = vmatprep.subr.mxu0 0.0
    %305 = vmatpush1.msra.mxu0 %v122
    %306 = vmatprep.subr.mxu0 0.0
    %307 = vmatpush1.msra.mxu0 %v123
    %308 = vmatprep.subr.mxu0 0.0
    %309 = vmatpush1.msra.mxu0 %v124
    %310 = vmatprep.subr.mxu0 0.0
    %311 = vmatpush1.msra.mxu0 %v125
    %312 = vmatprep.subr.mxu0 0.0
    %313 = vmatpush1.msra.mxu0 %v126
    %314 = vmatprep.subr.mxu0 0.0
    %315 = vmatpush1.msra.mxu0 %v127
    %316 = vmatprep.subr.mxu0 0.0
    %317 = vmatpush1.msra.mxu0 %v128
    %318 = vmatprep.subr.mxu0 0.0
    %319 = vmatpush1.msra.mxu0 %v129
    %320 = vmatprep.subr.mxu0 0.0
    %321 = vmatpush1.msra.mxu0 %v130
    %322 = vmatprep.subr.mxu0 0.0
    %323 = vmatpush1.msra.mxu0 %v131
    %324 = vmatprep.subr.mxu0 0.0
    %325 = vmatpush1.msra.mxu0 %v132
    %326 = vmatprep.subr.mxu0 0.0
    %327 = vmatpush1.msra.mxu0 %v133
    %328 = vmatprep.subr.mxu0 0.0
    %329 = vmatpush1.msra.mxu0 %v134
    %330 = vmatprep.subr.mxu0 0.0
    %331 = vmatpush1.msra.mxu0 %v135
    %332 = vmatprep.subr.mxu0 0.0
    %333 = vmatpush1.msra.mxu0 %v136
    %334 = vmatprep.subr.mxu0 0.0
    %335 = vmatpush1.msra.mxu0 %v137
    %336 = vmatprep.mubr.f32.mxu0 %v69
    %337 = vmatmul.mubr.f32.gmra.mrb[0].mxu0 %v68
    %v338 = vpop.f32.mrb[0].mxu0
    %v339 = vadd.f32 %v269, %v338
    %v340 = vpop.f32.mrb[0].mxu0
    %341 = vdwg.mxu0
    %342 = vmatprep.subr.mxu0 0.0
    %343 = vmatpush1.msra.mxu0 %v138
    %344 = vmatprep.subr.mxu0 0.0
    %345 = vmatpush1.msra.mxu0 %v139
    %346 = vmatprep.subr.mxu0 0.0
    %347 = vmatpush1.msra.mxu0 %v140
    %348 = vmatprep.subr.mxu0 0.0
    %349 = vmatpush1.msra.mxu0 %v141
    %350 = vmatprep.subr.mxu0 0.0
    %351 = vmatpush1.msra.mxu0 %v142
    %352 = vmatprep.subr.mxu0 0.0
    %353 = vmatpush1.msra.mxu0 %v143
    %354 = vmatprep.subr.mxu0 0.0
    %355 = vmatpush1.msra.mxu0 %v144
    %356 = vmatprep.subr.mxu0 0.0
    %357 = vmatpush1.msra.mxu0 %v145
    %358 = vmatprep.subr.mxu0 0.0
    %359 = vmatpush1.msra.mxu0 %v146
    %360 = vmatprep.subr.mxu0 0.0
    %361 = vmatpush1.msra.mxu0 %v147
    %362 = vmatprep.subr.mxu0 0.0
    %363 = vmatpush1.msra.mxu0 %v148
    %364 = vmatprep.subr.mxu0 0.0
    %365 = vmatpush1.msra.mxu0 %v149
    %366 = vmatprep.subr.mxu0 0.0
    %367 = vmatpush1.msra.mxu0 %v150
    %368 = vmatprep.subr.mxu0 0.0
    %369 = vmatpush1.msra.mxu0 %v151
    %370 = vmatprep.subr.mxu0 0.0
    %371 = vmatpush1.msra.mxu0 %v152
    %372 = vmatprep.subr.mxu0 0.0
    %373 = vmatpush1.msra.mxu0 %v153
    %374 = vmatprep.subr.mxu0 0.0
    %375 = vmatpush1.msra.mxu0 %v154
    %376 = vmatprep.subr.mxu0 0.0
    %377 = vmatpush1.msra.mxu0 %v155
    %378 = vmatprep.subr.mxu0 0.0
    %379 = vmatpush1.msra.mxu0 %v156
    %380 = vmatprep.subr.mxu0 0.0
    %381 = vmatpush1.msra.mxu0 %v157
    %382 = vmatprep.subr.mxu0 0.0
    %383 = vmatpush1.msra.mxu0 %v158
    %384 = vmatprep.subr.mxu0 0.0
    %385 = vmatpush1.msra.mxu0 %v159
    %386 = vmatprep.subr.mxu0 0.0
    %387 = vmatpush1.msra.mxu0 %v160
    %388 = vmatprep.subr.mxu0 0.0
    %389 = vmatpush1.msra.mxu0 %v161
    %390 = vmatprep.subr.mxu0 0.0
    %391 = vmatpush1.msra.mxu0 %v162
    %392 = vmatprep.subr.mxu0 0.0
    %393 = vmatpush1.msra.mxu0 %v163
    %394 = vmatprep.subr.mxu0 0.0
    %395 = vmatpush1.msra.mxu0 %v164
    %396 = vmatprep.subr.mxu0 0.0
    %397 = vmatpush1.msra.mxu0 %v165
    %398 = vmatprep.subr.mxu0 0.0
    %399 = vmatpush1.msra.mxu0 %v166
    %400 = vmatprep.subr.mxu0 0.0
    %401 = vmatpush1.msra.mxu0 %v167
    %402 = vmatprep.subr.mxu0 0.0
    %403 = vmatpush1.msra.mxu0 %v168
    %404 = vmatprep.subr.mxu0 0.0
    %405 = vmatpush1.msra.mxu0 %v169
    %406 = vmatprep.mubr.f32.mxu0 %v71
    %407 = vmatmul.mubr.f32.gmra.mrb[0].mxu0 %v70
    %v408 = vpop.f32.mrb[0].mxu0
    %v409 = vadd.f32 %v339, %v408
    %v410 = vpop.f32.mrb[0].mxu0
    %411 = vdwg.mxu0
    %412 = vmatprep.subr.mxu0 0.0
    %413 = vmatpush1.msra.mxu0 %v170
    %414 = vmatprep.subr.mxu0 0.0
    %415 = vmatpush1.msra.mxu0 %v171
    %416 = vmatprep.subr.mxu0 0.0
    %417 = vmatpush1.msra.mxu0 %v172
    %418 = vmatprep.subr.mxu0 0.0
    %419 = vmatpush1.msra.mxu0 %v173
    %420 = vmatprep.subr.mxu0 0.0
    %421 = vmatpush1.msra.mxu0 %v174
    %422 = vmatprep.subr.mxu0 0.0
    %423 = vmatpush1.msra.mxu0 %v175
    %424 = vmatprep.subr.mxu0 0.0
    %425 = vmatpush1.msra.mxu0 %v176
    %426 = vmatprep.subr.mxu0 0.0
    %427 = vmatpush1.msra.mxu0 %v177
    %428 = vmatprep.subr.mxu0 0.0
    %429 = vmatpush1.msra.mxu0 %v178
    %430 = vmatprep.subr.mxu0 0.0
    %431 = vmatpush1.msra.mxu0 %v179
    %432 = vmatprep.subr.mxu0 0.0
    %433 = vmatpush1.msra.mxu0 %v180
    %434 = vmatprep.subr.mxu0 0.0
    %435 = vmatpush1.msra.mxu0 %v181
    %436 = vmatprep.subr.mxu0 0.0
    %437 = vmatpush1.msra.mxu0 %v182
    %438 = vmatprep.subr.mxu0 0.0
    %439 = vmatpush1.msra.mxu0 %v183
    %440 = vmatprep.subr.mxu0 0.0
    %441 = vmatpush1.msra.mxu0 %v184
    %442 = vmatprep.subr.mxu0 0.0
    %443 = vmatpush1.msra.mxu0 %v185
    %444 = vmatprep.subr.mxu0 0.0
    %445 = vmatpush1.msra.mxu0 %v186
    %446 = vmatprep.subr.mxu0 0.0
    %447 = vmatpush1.msra.mxu0 %v187
    %448 = vmatprep.subr.mxu0 0.0
    %449 = vmatpush1.msra.mxu0 %v188
    %450 = vmatprep.subr.mxu0 0.0
    %451 = vmatpush1.msra.mxu0 %v189
    %452 = vmatprep.subr.mxu0 0.0
    %453 = vmatpush1.msra.mxu0 %v190
    %454 = vmatprep.subr.mxu0 0.0
    %455 = vmatpush1.msra.mxu0 %v191
    %456 = vmatprep.subr.mxu0 0.0
    %457 = vmatpush1.msra.mxu0 %v192
    %458 = vmatprep.subr.mxu0 0.0
    %459 = vmatpush1.msra.mxu0 %v193
    %460 = vmatprep.subr.mxu0 0.0
    %461 = vmatpush1.msra.mxu0 %v194
    %462 = vmatprep.subr.mxu0 0.0
    %463 = vmatpush1.msra.mxu0 %v195
    %464 = vmatprep.subr.mxu0 0.0
    %465 = vmatpush1.msra.mxu0 %v196
    %466 = vmatprep.subr.mxu0 0.0
    %467 = vmatpush1.msra.mxu0 %v197
    %468 = vmatprep.subr.mxu0 0.0
    %469 = vmatpush1.msra.mxu0 %v198
    %470 = vmatprep.subr.mxu0 0.0
    %471 = vmatpush1.msra.mxu0 %v199
    %472 = vmatprep.subr.mxu0 0.0
    %473 = vmatpush1.msra.mxu0 %v200
    %474 = vmatprep.subr.mxu0 0.0
    %475 = vmatpush1.msra.mxu0 %v201
    %476 = vmatprep.mubr.f32.mxu0 %v73
    %477 = vmatmul.mubr.f32.gmra.mrb[0].mxu0 %v72
    %v478 = vpop.f32.mrb[0].mxu0
    %v479 = vadd.f32 %v409, %v478
    %v480 = vpop.f32.mrb[0].mxu0
    %481 = vdwg.mxu0
    %v482 = vadd.f32 %v65, %v479
    %483 = vst [vmem:[#allocation2] sm:$0xff] %v482
    // Predicated region
    $region38: #{tpu_custom_call.1} parent=1 // pred_check
      %p484 = pneg %p60
    $region39: #{tpu_custom_call.1} parent=1 // pred_check_branch
      %486 = sbr.rel (%p484) target = $region41
    $region40: #{tpu_custom_call.1} parent=1 // pred_region
      %v487 = vld [vmem:[#allocation2] sm:$0xff]
      %v488 = vld [vmem:[%s2] sm:$0x1]
      %v490 = vlaneseq
      %v491 = vshrl.u32 %v490, 7
      %v492 = vsub.s32 0, %v491
      %v493 = vrot.slane %v488, %v492
      %v495 = vadd.f32 %v487, %v493
      %v496 = vmax.f32 %v495, 0.0
      %v497 = vld [vmem:[#allocation8] sm:$0xff]
      %v498 = vld [vmem:[#allocation8 + $0x8] sm:$0xff]
      %v499 = vld [vmem:[#allocation8 + $0x10] sm:$0xff]
      %v500 = vld [vmem:[#allocation8 + $0x18] sm:$0xff]
      %v501 = vld [vmem:[#allocation8 + $0x20] sm:$0xff]
      %v502 = vld [vmem:[#allocation8 + $0x28] sm:$0xff]
      %v503 = vld [vmem:[#allocation8 + $0x30] sm:$0xff]
      %v504 = vld [vmem:[#allocation8 + $0x38] sm:$0xff]
      %v505 = vld [vmem:[#allocation8 + $0x40] sm:$0xff]
      %v506 = vld [vmem:[#allocation8 + $0x48] sm:$0xff]
      %v507 = vld [vmem:[#allocation8 + $0x50] sm:$0xff]
      %v508 = vld [vmem:[#allocation8 + $0x58] sm:$0xff]
      %v509 = vld [vmem:[#allocation8 + $0x60] sm:$0xff]
      %v510 = vld [vmem:[#allocation8 + $0x68] sm:$0xff]
      %v511 = vld [vmem:[#allocation8 + $0x70] sm:$0xff]
      %v512 = vld [vmem:[#allocation8 + $0x78] sm:$0xff]
      %v513 = vld [vmem:[%s4] sm:$0x1]
      %v515 = vlaneseq
      %v516 = vshrl.u32 %v515, 7
      %v517 = vsub.s32 0, %v516
      %v518 = vrot.slane %v513, %v517
      %520 = vmatprep.subr.mxu0 0.0
      %521 = vmatpush1.msra.mxu0 %v497
      %522 = vmatprep.subr.mxu0 0.0
      %523 = vmatpush1.msra.mxu0 %v498
      %524 = vmatprep.subr.mxu0 0.0
      %525 = vmatpush1.msra.mxu0 %v499
      %526 = vmatprep.subr.mxu0 0.0
      %527 = vmatpush1.msra.mxu0 %v500
      %528 = vmatprep.subr.mxu0 0.0
      %529 = vmatpush1.msra.mxu0 %v501
      %530 = vmatprep.subr.mxu0 0.0
      %531 = vmatpush1.msra.mxu0 %v502
      %532 = vmatprep.subr.mxu0 0.0
      %533 = vmatpush1.msra.mxu0 %v503
      %534 = vmatprep.subr.mxu0 0.0
      %535 = vmatpush1.msra.mxu0 %v504
      %536 = vmatprep.subr.mxu0 0.0
      %537 = vmatpush1.msra.mxu0 %v505
      %538 = vmatprep.subr.mxu0 0.0
      %539 = vmatpush1.msra.mxu0 %v506
      %540 = vmatprep.subr.mxu0 0.0
      %541 = vmatpush1.msra.mxu0 %v507
      %542 = vmatprep.subr.mxu0 0.0
      %543 = vmatpush1.msra.mxu0 %v508
      %544 = vmatprep.subr.mxu0 0.0
      %545 = vmatpush1.msra.mxu0 %v509
      %546 = vmatprep.subr.mxu0 0.0
      %547 = vmatpush1.msra.mxu0 %v510
      %548 = vmatprep.subr.mxu0 0.0
      %549 = vmatpush1.msra.mxu0 %v511
      %550 = vmatprep.subr.mxu0 0.0
      %551 = vmatpush1.msra.mxu0 %v512
      %552 = vmatprep.subr.mxu0 0.0
      %553 = vmatpush1.msra.mxu0 0.0
      %554 = vmatprep.subr.mxu0 0.0
      %555 = vmatpush1.msra.mxu0 0.0
      %556 = vmatprep.subr.mxu0 0.0
      %557 = vmatpush1.msra.mxu0 0.0
      %558 = vmatprep.subr.mxu0 0.0
      %559 = vmatpush1.msra.mxu0 0.0
      %560 = vmatprep.subr.mxu0 0.0
      %561 = vmatpush1.msra.mxu0 0.0
      %562 = vmatprep.subr.mxu0 0.0
      %563 = vmatpush1.msra.mxu0 0.0
      %564 = vmatprep.subr.mxu0 0.0
      %565 = vmatpush1.msra.mxu0 0.0
      %566 = vmatprep.subr.mxu0 0.0
      %567 = vmatpush1.msra.mxu0 0.0
      %568 = vmatprep.subr.mxu0 0.0
      %569 = vmatpush1.msra.mxu0 0.0
      %570 = vmatprep.subr.mxu0 0.0
      %571 = vmatpush1.msra.mxu0 0.0
      %572 = vmatprep.subr.mxu0 0.0
      %573 = vmatpush1.msra.mxu0 0.0
      %574 = vmatprep.subr.mxu0 0.0
      %575 = vmatpush1.msra.mxu0 0.0
      %576 = vmatprep.subr.mxu0 0.0
      %577 = vmatpush1.msra.mxu0 0.0
      %578 = vmatprep.subr.mxu0 0.0
      %579 = vmatpush1.msra.mxu0 0.0
      %580 = vmatprep.subr.mxu0 0.0
      %581 = vmatpush1.msra.mxu0 0.0
      %582 = vmatprep.subr.mxu0 0.0
      %583 = vmatpush1.msra.mxu0 0.0
      %584 = vmatprep.mubr.f32.mxu0 0.0
      %585 = vmatmul.mubr.f32.gmra.mrb[0].mxu0 %v496
      %v586 = vpop.f32.mrb[0].mxu0
      %v587 = vadd.f32 %v518, %v586
      %v588 = vpop.f32.mrb[0].mxu0
      %589 = vdwg.mxu0
      %590 = vst [vmem:[#allocation9] sm:$0xff] %v587
    $region41: #{tpu_custom_call.1} parent=1 // pred_fallthru
      _
    // Predicated region
    $region42: #{tpu_custom_call.1} parent=1 // pred_check
      _
    $region43: #{tpu_custom_call.1} parent=1 // pred_check_branch
      %592 = sbr.rel (0) target = $region45
    $region44: #{tpu_custom_call.1} parent=1 // pred_region
      %s594 = ssub.s32 128, 128
      %595 = vsyncadd [#allocation5], %s594
      %s597 = sshll.u32 [#allocation9], 4
      %s598 = int_to_ptr.vmem [resolvable:$true] %s597
      %600 = dma.vmem_to_hbm [thread:$0]  %s598, 128, %s5, [#allocation5]
    $region45: #{tpu_custom_call.1} parent=1 // pred_fallthru
      _
    // Predicated region
    $region46: #{tpu_custom_call.1} parent=1 // pred_check
      _
    $region47: #{tpu_custom_call.1} parent=1 // pred_check_branch
      %602 = sbr.rel (0) target = $region49
    $region48: #{tpu_custom_call.1} parent=1 // pred_region
      %603 = dma.done [#allocation5], 128
    $region49: #{tpu_custom_call.1} parent=1 // pred_fallthru
      _
    %604 = vsyncpa [#allocation4], 1
    %605 = vsyncpa [#allocation7], 1
    %606 = vsyncpa [#allocation5], 1

</llo_original>
